<compile_context>
chip_gen: v7x
topology: tpu7x:2x2x1
jax: 0.10.0
libtpu: 0.0.40
codegen_flags: <defaults>
</compile_context>

<pallas_src>
import functools

import jax
import jax.numpy as jnp
from jax.experimental import pallas as pl
from jax.experimental.pallas import tpu as pltpu


_VMEM_LIMIT = 48 * 1024 * 1024  # conservative: fits v5e/v6e (128 MiB) and v7x (64 MiB)


# --------------------------- fused layer kernel -------------------------------
# out_tile = relu?( x_cat_tile @ W + b [+ residual_tile] )


def _make_layer_kernel(apply_relu, has_residual):
    if has_residual:
        def kernel(x_ref, w_ref, b_ref, r_ref, o_ref):
            acc = jnp.dot(x_ref[...], w_ref[...],
                          preferred_element_type=jnp.float32)
            acc = acc + b_ref[...] + r_ref[...]
            if apply_relu:
                acc = jnp.maximum(acc, 0.0)
            o_ref[...] = acc
    else:
        def kernel(x_ref, w_ref, b_ref, o_ref):
            acc = jnp.dot(x_ref[...], w_ref[...],
                          preferred_element_type=jnp.float32)
            acc = acc + b_ref[...]
            if apply_relu:
                acc = jnp.maximum(acc, 0.0)
            o_ref[...] = acc
    return kernel


def _bytes(*arrays):
    return sum(int(a.size) * a.dtype.itemsize for a in arrays)


def fused_linear(x_cat, w, b, residual=None, *, relu=True, tile_e=128):
    """x_cat: (E, Kc) bf16, w: (Kc, Cout) bf16, b: (1, Cout) f32,
       residual: optional (E, Cout) f32.  Returns (E, Cout) f32."""
    E, Kc = x_cat.shape
    Cout = w.shape[1]
    assert E % tile_e == 0 and tile_e % 8 == 0

    kernel = _make_layer_kernel(relu, residual is not None)

    in_specs = [
        pl.BlockSpec((tile_e, Kc), lambda i: (i, 0)),   # activation tile (pipelined)
        pl.BlockSpec((Kc, Cout), lambda i: (0, 0)),     # weights (VMEM-resident)
        pl.BlockSpec((1, Cout), lambda i: (0, 0)),      # bias (VMEM-resident)
    ]
    args = [x_cat, w, b]
    if residual is not None:
        in_specs.append(pl.BlockSpec((tile_e, Cout), lambda i: (i, 0)))
        args.append(residual)

    flops = 2 * E * Kc * Cout
    bytes_accessed = _bytes(*args) + E * Cout * 4

    return pl.pallas_call(
        kernel,
        out_shape=jax.ShapeDtypeStruct((E, Cout), jnp.float32),
        grid=(E // tile_e,),
        in_specs=in_specs,
        out_specs=pl.BlockSpec((tile_e, Cout), lambda i: (i, 0)),
        compiler_params=pltpu.CompilerParams(
            dimension_semantics=("parallel",),
            vmem_limit_bytes=_VMEM_LIMIT),
        cost_estimate=pl.CostEstimate(
            flops=flops, transcendentals=0, bytes_accessed=bytes_accessed),
    )(*args)


# --------------------------- pool + fc kernel ---------------------------------
# AdaptiveAvgPool1d over E (exact when E % P == 0), then Linear, without building
# a pooling matrix in-kernel and without a (1, P*C) flatten relayout.
# TODO(synk): general AdaptiveAvgPool1d (uneven bins) when E % pool_output_size != 0.


def pool_fc(h, wf, bfc, *, pool_output_size, category_num):
    """h: (E, C) f32, wf: (P*C, category_num) bf16, bfc: (1, category_num) f32."""
    E, C = h.shape
    P = pool_output_size
    assert E % P == 0
    chunk = E // P

    def kernel(h_ref, wf_ref, bfc_ref, o_ref):
        acc = bfc_ref[...]                                     # (1, cat) f32
        for p in range(P):                                     # small static loop
            seg = h_ref[p * chunk:(p + 1) * chunk, :]          # (chunk, C) f32
            m = jnp.mean(seg, axis=0, keepdims=True)           # sublane reduce
            acc = acc + jnp.dot(m.astype(jnp.bfloat16),
                                wf_ref[p * C:(p + 1) * C, :],
                                preferred_element_type=jnp.float32)
        o_ref[...] = acc

    flops = E * C + 2 * P * C * category_num
    bytes_accessed = _bytes(h, wf, bfc) + category_num * 4

    return pl.pallas_call(
        kernel,
        out_shape=jax.ShapeDtypeStruct((1, category_num), jnp.float32),
        in_specs=[pl.BlockSpec(memory_space=pltpu.MemorySpace.VMEM)] * 3,
        out_specs=pl.BlockSpec(memory_space=pltpu.MemorySpace.VMEM),
        compiler_params=pltpu.CompilerParams(vmem_limit_bytes=_VMEM_LIMIT),
        cost_estimate=pl.CostEstimate(
            flops=flops, transcendentals=0, bytes_accessed=bytes_accessed),
    )(h, wf, bfc)


# ------------------------------ forward ---------------------------------------


@functools.partial(jax.jit, static_argnames=("k_list", "pool_output_size",
                                             "category_num", "tile_e"))
def half_edge_resnet_forward(x, half_edges, params, *, k_list,
                             pool_output_size, category_num, tile_e=128):
    """params: flat tuple (w0, b0, [w1, b1, w2, b2] * n_blocks, fc_w, fc_b),
       weights stored (in_features, out_features) f32, biases (1, out) f32."""
    E = x.shape[0]

    def gather_concat(feat, n_neighbors):
        # Single O(E*K*C) gather of all neighbor rows (one XLA gather), then the
        # (E, K+1, C) stack is flattened to the (E, (K+1)*C) concat layout.
        C = feat.shape[1]
        nbr = jnp.take(feat, half_edges[:, :n_neighbors], axis=0)   # (E, K, C)
        cat = jnp.concatenate([feat[:, None, :], nbr], axis=1)      # (E, K+1, C)
        return cat.reshape(E, (n_neighbors + 1) * C).astype(jnp.bfloat16)

    idx = 0
    w0 = params[idx].astype(jnp.bfloat16)
    b0 = params[idx + 1]
    idx += 2
    h = fused_linear(gather_concat(x, k_list[0]), w0, b0,
                     relu=True, tile_e=tile_e)

    for kb in k_list[1:]:
        w1 = params[idx].astype(jnp.bfloat16)
        b1 = params[idx + 1]
        w2 = params[idx + 2].astype(jnp.bfloat16)
        b2 = params[idx + 3]
        idx += 4
        y = fused_linear(gather_concat(h, kb), w1, b1,
                         relu=True, tile_e=tile_e)
        # ReLU(h + conv2_noact(y)) fused into one kernel (residual + ReLU).
        h = fused_linear(gather_concat(y, kb), w2, b2, residual=h,
                         relu=True, tile_e=tile_e)

    wf = params[idx].astype(jnp.bfloat16)
    bfc = params[idx + 1]
    out = pool_fc(h, wf, bfc, pool_output_size=pool_output_size,
                  category_num=category_num)
    return out[0]     # (category_num,) — matches PyTorch's 1-D Linear output


# ------------------------- pure-JAX reference ---------------------------------


def reference_forward(x, he, params, k_list, pool_output_size):
    def conv(feat, w, b, n_neighbors, act, residual=None):
        cat = jnp.concatenate(
            [feat] + [feat[he[:, k]] for k in range(n_neighbors)], axis=1)
        y = jnp.dot(cat.astype(jnp.bfloat16), w.astype(jnp.bfloat16),
                    preferred_element_type=jnp.float32) + b
        if residual is not None:
            y = y + residual
        return jnp.maximum(y, 0.0) if act else y

    idx = 0
    h = conv(x, params[idx], params[idx + 1], k_list[0], True)
    idx += 2
    for kb in k_list[1:]:
        y = conv(h, params[idx], params[idx + 1], kb, True)
        h = conv(y, params[idx + 2], params[idx + 3], kb, True, residual=h)
        idx += 4
    P = pool_output_size
    pooled = h.reshape(P, h.shape[0] // P, h.shape[1]).mean(axis=1)
    v = pooled.reshape(1, -1).astype(jnp.bfloat16)
    wf = params[idx].astype(jnp.bfloat16)
    return (jnp.dot(v, wf, preferred_element_type=jnp.float32)
            + params[idx + 1])[0]


# ------------------------------- main ------------------------------------------


if __name__ == "__main__":
    # small, deterministic configuration (lane-dense mid channels, tiled E axis)
    E = 512                      # number of half edges (multiple of tile_e and P)
    in_channel_num = 16
    mid_channel_num = 128        # multiple of 128 -> lane-dense activations
    pool_output_size = 4
    category_num = 10
    k_list = (4, 3, 3)           # 1 HalfEdgeConv + 2 HalfEdgeResidualBlocks
    k_max = max(k_list)
    tile_e = 128

    key = jax.random.PRNGKey(0)
    keys = iter(jax.random.split(key, 64))

    x = jax.random.normal(next(keys), (E, in_channel_num), jnp.float32)
    half_edges = jax.random.randint(next(keys), (E, k_max), 0, E,
                                    dtype=jnp.int32)

    def linear_params(fan_in, fan_out):
        w = 0.05 * jax.random.normal(next(keys), (fan_in, fan_out), jnp.float32)
        b = 0.05 * jax.random.normal(next(keys), (1, fan_out), jnp.float32)
        return [w, b]

    params = []
    # first HalfEdgeConv: (K0+1)*Cin -> Cmid
    params += linear_params((k_list[0] + 1) * in_channel_num, mid_channel_num)
    # residual blocks: two convs each, (Kb+1)*Cmid -> Cmid
    for kb in k_list[1:]:
        params += linear_params((kb + 1) * mid_channel_num, mid_channel_num)
        params += linear_params((kb + 1) * mid_channel_num, mid_channel_num)
    # fc: pool_output_size*Cmid -> category_num (stored as (in, out) == torch W.T)
    params += linear_params(pool_output_size * mid_channel_num, category_num)
    params = tuple(params)

    out = half_edge_resnet_forward(
        x, half_edges, params,
        k_list=k_list, pool_output_size=pool_output_size,
        category_num=category_num, tile_e=tile_e)
    out = jax.block_until_ready(out)

    ref = reference_forward(x, half_edges, params, k_list, pool_output_size)
    assert out.shape == (category_num,)
    assert jnp.allclose(out, ref, atol=1e-2, rtol=1e-2), (out, ref)

    print("KERNEL_OK")
</pallas_src>

<mosaic_0001>
module attributes {stable_mosaic.version = 11 : i64} {
  func.func @kernel(%arg0: i32, %arg1: memref<128x80xbf16, #tpu.memory_space<vmem>>, %arg2: memref<80x128xbf16, #tpu.memory_space<vmem>>, %arg3: memref<1x128xf32, #tpu.memory_space<vmem>>, %arg4: memref<128x128xf32, #tpu.memory_space<vmem>>) attributes {dimension_semantics = [#tpu.dimension_semantics<parallel>], iteration_bounds = array<i64: 4>, scalar_prefetch = 0 : i64, scratch_operands = 0 : i64, tpu.core_type = #tpu.core_type<tc>, window_params = [{transform_indices = @transform_0, window_bounds = array<i64: 128, 80>}, {pipeline_mode = #tpu.pipeline_mode<synchronous>, transform_indices = @transform_1, window_bounds = array<i64: 80, 128>}, {pipeline_mode = #tpu.pipeline_mode<synchronous>, transform_indices = @transform_2, window_bounds = array<i64: 1, 128>}, {transform_indices = @transform_3, window_bounds = array<i64: 128, 128>}]} {
    %c0 = arith.constant 0 : index
    %c0_0 = arith.constant 0 : index
    %0 = vector.load %arg1[%c0, %c0_0] : memref<128x80xbf16, #tpu.memory_space<vmem>>, vector<128x80xbf16>
    %c0_1 = arith.constant 0 : index
    %c0_2 = arith.constant 0 : index
    %1 = vector.load %arg2[%c0_1, %c0_2] : memref<80x128xbf16, #tpu.memory_space<vmem>>, vector<80x128xbf16>
    %cst = arith.constant dense<0.000000e+00> : vector<128x128xf32>
    %2 = tpu.matmul %0, %1, %cst {dimension_numbers = #tpu.dot_dimension_numbers<[1], [0], [0], [1], [0, 0, 1, 1], [], []>} : vector<128x80xbf16>, vector<80x128xbf16>, vector<128x128xf32> -> vector<128x128xf32>
    %c0_3 = arith.constant 0 : index
    %c0_4 = arith.constant 0 : index
    %3 = vector.load %arg3[%c0_3, %c0_4] : memref<1x128xf32, #tpu.memory_space<vmem>>, vector<1x128xf32>
    %4 = vector.broadcast %3 : vector<1x128xf32> to vector<128x128xf32>
    %5 = arith.addf %2, %4 : vector<128x128xf32>
    %cst_5 = arith.constant 0.000000e+00 : f32
    %6 = vector.broadcast %cst_5 : f32 to vector<128x128xf32>
    %7 = arith.maximumf %5, %6 : vector<128x128xf32>
    %c0_6 = arith.constant 0 : index
    %c0_7 = arith.constant 0 : index
    %8 = vector.load %arg4[%c0_6, %c0_7] : memref<128x128xf32, #tpu.memory_space<vmem>>, vector<128x128xf32>
    tpu.vector_store %arg4[%c0_6, %c0_7], %7 {strides = array<i32>} : memref<128x128xf32, #tpu.memory_space<vmem>>, vector<128x128xf32>,
    return
  }
  func.func @transform_0(%arg0: i32) -> (i32, i32) {
    %c0_i32 = arith.constant 0 : i32
    %c0_i32_0 = arith.constant 0 : i32
    return %arg0, %c0_i32 : i32, i32
  }
  func.func @transform_1(%arg0: i32) -> (i32, i32) {
    %c0_i32 = arith.constant 0 : i32
    %c0_i32_0 = arith.constant 0 : i32
    %c0_i32_1 = arith.constant 0 : i32
    return %c0_i32, %c0_i32_0 : i32, i32
  }
  func.func @transform_2(%arg0: i32) -> (i32, i32) {
    %c0_i32 = arith.constant 0 : i32
    %c0_i32_0 = arith.constant 0 : i32
    %c0_i32_1 = arith.constant 0 : i32
    return %c0_i32, %c0_i32_0 : i32, i32
  }
  func.func @transform_3(%arg0: i32) -> (i32, i32) {
    %c0_i32 = arith.constant 0 : i32
    %c0_i32_0 = arith.constant 0 : i32
    return %arg0, %c0_i32 : i32, i32
  }
}

module attributes {stable_mosaic.version = 11 : i64} {
  func.func @kernel(%arg0: i32, %arg1: memref<128x512xbf16, #tpu.memory_space<vmem>>, %arg2: memref<512x128xbf16, #tpu.memory_space<vmem>>, %arg3: memref<1x128xf32, #tpu.memory_space<vmem>>, %arg4: memref<128x128xf32, #tpu.memory_space<vmem>>) attributes {dimension_semantics = [#tpu.dimension_semantics<parallel>], iteration_bounds = array<i64: 4>, scalar_prefetch = 0 : i64, scratch_operands = 0 : i64, tpu.core_type = #tpu.core_type<tc>, window_params = [{transform_indices = @transform_0, window_bounds = array<i64: 128, 512>}, {pipeline_mode = #tpu.pipeline_mode<synchronous>, transform_indices = @transform_1, window_bounds = array<i64: 512, 128>}, {pipeline_mode = #tpu.pipeline_mode<synchronous>, transform_indices = @transform_2, window_bounds = array<i64: 1, 128>}, {transform_indices = @transform_3, window_bounds = array<i64: 128, 128>}]} {
    %c0 = arith.constant 0 : index
    %c0_0 = arith.constant 0 : index
    %0 = vector.load %arg1[%c0, %c0_0] : memref<128x512xbf16, #tpu.memory_space<vmem>>, vector<128x512xbf16>
    %c0_1 = arith.constant 0 : index
    %c0_2 = arith.constant 0 : index
    %1 = vector.load %arg2[%c0_1, %c0_2] : memref<512x128xbf16, #tpu.memory_space<vmem>>, vector<512x128xbf16>
    %cst = arith.constant dense<0.000000e+00> : vector<128x128xf32>
    %2 = tpu.matmul %0, %1, %cst {dimension_numbers = #tpu.dot_dimension_numbers<[1], [0], [0], [1], [0, 0, 1, 1], [], []>} : vector<128x512xbf16>, vector<512x128xbf16>, vector<128x128xf32> -> vector<128x128xf32>
    %c0_3 = arith.constant 0 : index
    %c0_4 = arith.constant 0 : index
    %3 = vector.load %arg3[%c0_3, %c0_4] : memref<1x128xf32, #tpu.memory_space<vmem>>, vector<1x128xf32>
    %4 = vector.broadcast %3 : vector<1x128xf32> to vector<128x128xf32>
    %5 = arith.addf %2, %4 : vector<128x128xf32>
    %cst_5 = arith.constant 0.000000e+00 : f32
    %6 = vector.broadcast %cst_5 : f32 to vector<128x128xf32>
    %7 = arith.maximumf %5, %6 : vector<128x128xf32>
    %c0_6 = arith.constant 0 : index
    %c0_7 = arith.constant 0 : index
    %8 = vector.load %arg4[%c0_6, %c0_7] : memref<128x128xf32, #tpu.memory_space<vmem>>, vector<128x128xf32>
    tpu.vector_store %arg4[%c0_6, %c0_7], %7 {strides = array<i32>} : memref<128x128xf32, #tpu.memory_space<vmem>>, vector<128x128xf32>,
    return
  }
  func.func @transform_0(%arg0: i32) -> (i32, i32) {
    %c0_i32 = arith.constant 0 : i32
    %c0_i32_0 = arith.constant 0 : i32
    return %arg0, %c0_i32 : i32, i32
  }
  func.func @transform_1(%arg0: i32) -> (i32, i32) {
    %c0_i32 = arith.constant 0 : i32
    %c0_i32_0 = arith.constant 0 : i32
    %c0_i32_1 = arith.constant 0 : i32
    return %c0_i32, %c0_i32_0 : i32, i32
  }
  func.func @transform_2(%arg0: i32) -> (i32, i32) {
    %c0_i32 = arith.constant 0 : i32
    %c0_i32_0 = arith.constant 0 : i32
    %c0_i32_1 = arith.constant 0 : i32
    return %c0_i32, %c0_i32_0 : i32, i32
  }
  func.func @transform_3(%arg0: i32) -> (i32, i32) {
    %c0_i32 = arith.constant 0 : i32
    %c0_i32_0 = arith.constant 0 : i32
    return %arg0, %c0_i32 : i32, i32
  }
}

module attributes {stable_mosaic.version = 11 : i64} {
  func.func @kernel(%arg0: i32, %arg1: memref<128x512xbf16, #tpu.memory_space<vmem>>, %arg2: memref<512x128xbf16, #tpu.memory_space<vmem>>, %arg3: memref<1x128xf32, #tpu.memory_space<vmem>>, %arg4: memref<128x128xf32, #tpu.memory_space<vmem>>, %arg5: memref<128x128xf32, #tpu.memory_space<vmem>>) attributes {dimension_semantics = [#tpu.dimension_semantics<parallel>], iteration_bounds = array<i64: 4>, scalar_prefetch = 0 : i64, scratch_operands = 0 : i64, tpu.core_type = #tpu.core_type<tc>, window_params = [{transform_indices = @transform_0, window_bounds = array<i64: 128, 512>}, {pipeline_mode = #tpu.pipeline_mode<synchronous>, transform_indices = @transform_1, window_bounds = array<i64: 512, 128>}, {pipeline_mode = #tpu.pipeline_mode<synchronous>, transform_indices = @transform_2, window_bounds = array<i64: 1, 128>}, {transform_indices = @transform_3, window_bounds = array<i64: 128, 128>}, {transform_indices = @transform_4, window_bounds = array<i64: 128, 128>}]} {
    %c0 = arith.constant 0 : index
    %c0_0 = arith.constant 0 : index
    %0 = vector.load %arg1[%c0, %c0_0] : memref<128x512xbf16, #tpu.memory_space<vmem>>, vector<128x512xbf16>
    %c0_1 = arith.constant 0 : index
    %c0_2 = arith.constant 0 : index
    %1 = vector.load %arg2[%c0_1, %c0_2] : memref<512x128xbf16, #tpu.memory_space<vmem>>, vector<512x128xbf16>
    %cst = arith.constant dense<0.000000e+00> : vector<128x128xf32>
    %2 = tpu.matmul %0, %1, %cst {dimension_numbers = #tpu.dot_dimension_numbers<[1], [0], [0], [1], [0, 0, 1, 1], [], []>} : vector<128x512xbf16>, vector<512x128xbf16>, vector<128x128xf32> -> vector<128x128xf32>
    %c0_3 = arith.constant 0 : index
    %c0_4 = arith.constant 0 : index
    %3 = vector.load %arg3[%c0_3, %c0_4] : memref<1x128xf32, #tpu.memory_space<vmem>>, vector<1x128xf32>
    %4 = vector.broadcast %3 : vector<1x128xf32> to vector<128x128xf32>
    %5 = arith.addf %2, %4 : vector<128x128xf32>
    %c0_5 = arith.constant 0 : index
    %c0_6 = arith.constant 0 : index
    %6 = vector.load %arg4[%c0_5, %c0_6] : memref<128x128xf32, #tpu.memory_space<vmem>>, vector<128x128xf32>
    %7 = arith.addf %5, %6 : vector<128x128xf32>
    %cst_7 = arith.constant 0.000000e+00 : f32
    %8 = vector.broadcast %cst_7 : f32 to vector<128x128xf32>
    %9 = arith.maximumf %7, %8 : vector<128x128xf32>
    %c0_8 = arith.constant 0 : index
    %c0_9 = arith.constant 0 : index
    %10 = vector.load %arg5[%c0_8, %c0_9] : memref<128x128xf32, #tpu.memory_space<vmem>>, vector<128x128xf32>
    tpu.vector_store %arg5[%c0_8, %c0_9], %9 {strides = array<i32>} : memref<128x128xf32, #tpu.memory_space<vmem>>, vector<128x128xf32>,
    return
  }
  func.func @transform_0(%arg0: i32) -> (i32, i32) {
    %c0_i32 = arith.constant 0 : i32
    %c0_i32_0 = arith.constant 0 : i32
    return %arg0, %c0_i32 : i32, i32
  }
  func.func @transform_1(%arg0: i32) -> (i32, i32) {
    %c0_i32 = arith.constant 0 : i32
    %c0_i32_0 = arith.constant 0 : i32
    %c0_i32_1 = arith.constant 0 : i32
    return %c0_i32, %c0_i32_0 : i32, i32
  }
  func.func @transform_2(%arg0: i32) -> (i32, i32) {
    %c0_i32 = arith.constant 0 : i32
    %c0_i32_0 = arith.constant 0 : i32
    %c0_i32_1 = arith.constant 0 : i32
    return %c0_i32, %c0_i32_0 : i32, i32
  }
  func.func @transform_3(%arg0: i32) -> (i32, i32) {
    %c0_i32 = arith.constant 0 : i32
    %c0_i32_0 = arith.constant 0 : i32
    return %arg0, %c0_i32 : i32, i32
  }
  func.func @transform_4(%arg0: i32) -> (i32, i32) {
    %c0_i32 = arith.constant 0 : i32
    %c0_i32_0 = arith.constant 0 : i32
    return %arg0, %c0_i32 : i32, i32
  }
}

module attributes {stable_mosaic.version = 11 : i64} {
  func.func @kernel(%arg0: memref<512x128xf32, #tpu.memory_space<vmem>>, %arg1: memref<512x10xbf16, #tpu.memory_space<vmem>>, %arg2: memref<1x10xf32, #tpu.memory_space<vmem>>, %arg3: memref<1x10xf32, #tpu.memory_space<vmem>>) attributes {dimension_semantics = [], scalar_prefetch = 0 : i64, scratch_operands = 0 : i64, tpu.core_type = #tpu.core_type<tc>} {
    %c0 = arith.constant 0 : index
    %c0_0 = arith.constant 0 : index
    %0 = vector.load %arg2[%c0, %c0_0] : memref<1x10xf32, #tpu.memory_space<vmem>>, vector<1x10xf32>
    %c0_1 = arith.constant 0 : index
    %c0_2 = arith.constant 0 : index
    %1 = vector.load %arg0[%c0_1, %c0_2] : memref<512x128xf32, #tpu.memory_space<vmem>>, vector<128x128xf32>
    %cst = arith.constant dense<0.000000e+00> : vector<128xf32>
    %2 = vector.multi_reduction <add>, %1, %cst [0] : vector<128x128xf32> to vector<128xf32>
    %3 = vector.shape_cast %2 : vector<128xf32> to vector<1x128xf32>
    %cst_3 = arith.constant 1.280000e+02 : f32
    %4 = vector.broadcast %cst_3 : f32 to vector<1x128xf32>
    %5 = arith.divf %3, %4 : vector<1x128xf32>
    %6 = arith.truncf %5 : vector<1x128xf32> to vector<1x128xbf16>
    %c0_4 = arith.constant 0 : index
    %c0_5 = arith.constant 0 : index
    %7 = vector.load %arg1[%c0_4, %c0_5] : memref<512x10xbf16, #tpu.memory_space<vmem>>, vector<128x10xbf16>
    %cst_6 = arith.constant dense<0.000000e+00> : vector<1x10xf32>
    %8 = tpu.matmul %6, %7, %cst_6 {dimension_numbers = #tpu.dot_dimension_numbers<[1], [0], [0], [1], [0, 0, 1, 1], [], []>} : vector<1x128xbf16>, vector<128x10xbf16>, vector<1x10xf32> -> vector<1x10xf32>
    %9 = arith.addf %0, %8 : vector<1x10xf32>
    %c128 = arith.constant 128 : index
    %c0_7 = arith.constant 0 : index
    %10 = vector.load %arg0[%c128, %c0_7] : memref<512x128xf32, #tpu.memory_space<vmem>>, vector<128x128xf32>
    %cst_8 = arith.constant dense<0.000000e+00> : vector<128xf32>
    %11 = vector.multi_reduction <add>, %10, %cst_8 [0] : vector<128x128xf32> to vector<128xf32>
    %12 = vector.shape_cast %11 : vector<128xf32> to vector<1x128xf32>
    %cst_9 = arith.constant 1.280000e+02 : f32
    %13 = vector.broadcast %cst_9 : f32 to vector<1x128xf32>
    %14 = arith.divf %12, %13 : vector<1x128xf32>
    %15 = arith.truncf %14 : vector<1x128xf32> to vector<1x128xbf16>
    %c128_10 = arith.constant 128 : index
    %c0_11 = arith.constant 0 : index
    %16 = vector.load %arg1[%c128_10, %c0_11] : memref<512x10xbf16, #tpu.memory_space<vmem>>, vector<128x10xbf16>
    %cst_12 = arith.constant dense<0.000000e+00> : vector<1x10xf32>
    %17 = tpu.matmul %15, %16, %cst_12 {dimension_numbers = #tpu.dot_dimension_numbers<[1], [0], [0], [1], [0, 0, 1, 1], [], []>} : vector<1x128xbf16>, vector<128x10xbf16>, vector<1x10xf32> -> vector<1x10xf32>
    %18 = arith.addf %9, %17 : vector<1x10xf32>
    %c256 = arith.constant 256 : index
    %c0_13 = arith.constant 0 : index
    %19 = vector.load %arg0[%c256, %c0_13] : memref<512x128xf32, #tpu.memory_space<vmem>>, vector<128x128xf32>
    %cst_14 = arith.constant dense<0.000000e+00> : vector<128xf32>
    %20 = vector.multi_reduction <add>, %19, %cst_14 [0] : vector<128x128xf32> to vector<128xf32>
    %21 = vector.shape_cast %20 : vector<128xf32> to vector<1x128xf32>
    %cst_15 = arith.constant 1.280000e+02 : f32
    %22 = vector.broadcast %cst_15 : f32 to vector<1x128xf32>
    %23 = arith.divf %21, %22 : vector<1x128xf32>
    %24 = arith.truncf %23 : vector<1x128xf32> to vector<1x128xbf16>
    %c256_16 = arith.constant 256 : index
    %c0_17 = arith.constant 0 : index
    %25 = vector.load %arg1[%c256_16, %c0_17] : memref<512x10xbf16, #tpu.memory_space<vmem>>, vector<128x10xbf16>
    %cst_18 = arith.constant dense<0.000000e+00> : vector<1x10xf32>
    %26 = tpu.matmul %24, %25, %cst_18 {dimension_numbers = #tpu.dot_dimension_numbers<[1], [0], [0], [1], [0, 0, 1, 1], [], []>} : vector<1x128xbf16>, vector<128x10xbf16>, vector<1x10xf32> -> vector<1x10xf32>
    %27 = arith.addf %18, %26 : vector<1x10xf32>
    %c384 = arith.constant 384 : index
    %c0_19 = arith.constant 0 : index
    %28 = vector.load %arg0[%c384, %c0_19] : memref<512x128xf32, #tpu.memory_space<vmem>>, vector<128x128xf32>
    %cst_20 = arith.constant dense<0.000000e+00> : vector<128xf32>
    %29 = vector.multi_reduction <add>, %28, %cst_20 [0] : vector<128x128xf32> to vector<128xf32>
    %30 = vector.shape_cast %29 : vector<128xf32> to vector<1x128xf32>
    %cst_21 = arith.constant 1.280000e+02 : f32
    %31 = vector.broadcast %cst_21 : f32 to vector<1x128xf32>
    %32 = arith.divf %30, %31 : vector<1x128xf32>
    %33 = arith.truncf %32 : vector<1x128xf32> to vector<1x128xbf16>
    %c384_22 = arith.constant 384 : index
    %c0_23 = arith.constant 0 : index
    %34 = vector.load %arg1[%c384_22, %c0_23] : memref<512x10xbf16, #tpu.memory_space<vmem>>, vector<128x10xbf16>
    %cst_24 = arith.constant dense<0.000000e+00> : vector<1x10xf32>
    %35 = tpu.matmul %33, %34, %cst_24 {dimension_numbers = #tpu.dot_dimension_numbers<[1], [0], [0], [1], [0, 0, 1, 1], [], []>} : vector<1x128xbf16>, vector<128x10xbf16>, vector<1x10xf32> -> vector<1x10xf32>
    %36 = arith.addf %27, %35 : vector<1x10xf32>
    %c0_25 = arith.constant 0 : index
    %c0_26 = arith.constant 0 : index
    %37 = vector.load %arg3[%c0_25, %c0_26] : memref<1x10xf32, #tpu.memory_space<vmem>>, vector<1x10xf32>
    tpu.vector_store %arg3[%c0_25, %c0_26], %36 {strides = array<i32>} : memref<1x10xf32, #tpu.memory_space<vmem>>, vector<1x10xf32>,
    return
  }
}

</mosaic_0001>

<llo_original>
// kernel: half_edge_resnet_forward.6
$region0: #{half_edge_resnet_forward.6}
  #allocation0 [shape = 'u32[]', space=smem, size = 0x4, offset = 0x4, fixed_abs, tag = 'smem constant byte address 0x4 - core index']
  #allocation1 [shape = 'u32[144,128]{1,0:T(1,128)}', space=vmem, size = 0x12000, scoped, tag = 'internal scratch']
  %s0 = inlined_call_operand.vmem [shape: bf16[512,80], index: 0, kind: input, shape index: {}]
  %s1 = inlined_call_operand.vmem [shape: bf16[80,128], index: 1, kind: input, shape index: {}]
  %s2 = inlined_call_operand.vmem [shape: f32[1,128], index: 2, kind: input, shape index: {}]
  %s3 = inlined_call_operand.vmem [shape: f32[512,128], index: 3, kind: output, shape index: {}]
  %s4 = sld [smem:[#allocation0]]
  $region45: #{half_edge_resnet_forward.6} parent=0
    _
  %s6 = ssub.s32 1, %s4
  %s7 = scalar_select 0, %s6, %s4
  loop: start=0, step=1, limit=6
  $region2: #{half_edge_resnet_forward.6} parent=0 // loop_pre_header
    _
  $region3: #{half_edge_resnet_forward.6} parent=0 // loop_header
    %s9 = sphi 0, %s13
    %p10 = scmp.ge.s32.totalorder %s9, 6
    %s19 = sphi 0, %s21
    %s22 = sphi 0, %s19
    %s23 = sphi 0, %s22
    %s39 = sphi 0, %s23
    %s43 = sphi 0, %s43
    %s45 = sphi 0, %s43
    %s46 = sphi 0, %s45
    %s60 = sphi 0, %s46
    %s64 = sphi 0, %s64
    %s66 = sphi 0, %s64
    %s67 = sphi 0, %s66
    %s81 = sphi 0, %s67
    %s87 = sphi 0, %s89
    %s90 = sphi 0, %s87
    %s91 = sphi 0, %s90
    %s107 = sphi 0, %s91
  $region4: #{half_edge_resnet_forward.6} parent=0 // loop_header_branch
    %12 = sbr.rel (%p10) target = $region8
  $region5: #{half_edge_resnet_forward.6} parent=0 // loop_body
    %s14 = ssub.s32 %s9, 1
    %s15 = ssub.s32 %s9, 2
    %s16 = sadd.s32 %s9, 1
    %s17 = ssub.s32 %s9, %s16
    %p18 = scmp.eq.s32.totalorder %s17, 0
    %s20 = sadd.s32 %s19, 1
    %s21 = scalar_select %p18, %s19, %s20
    %p24 = pneg %p18
    %p25 = scmp.eq.s32.totalorder %s9, 3
    %p26 = por %p24, %p25
    %p27 = scmp.ne.s32.totalorder %s19, %s22
    %p28 = scmp.eq.s32.totalorder %s9, 0
    %p29 = por %p27, %p28
    %p30 = scmp.ne.s32.totalorder %s19, %s22
    %p31 = scmp.eq.s32.totalorder %s14, 3
    %p32 = por %p30, %p31
    %p33 = scmp.ne.s32.totalorder %s22, %s23
    %p34 = scmp.eq.s32.totalorder %s14, 0
    %p35 = por %p33, %p34
    %p36 = scmp.ne.s32.totalorder %s22, %s23
    %p37 = scmp.eq.s32.totalorder %s15, 3
    %p38 = por %p36, %p37
    %p40 = scmp.ne.s32.totalorder %s23, %s39
    %p41 = scmp.eq.s32.totalorder %s15, 0
    %p42 = por %p40, %p41
    %s44 = sadd.s32 %s43, 1
    %p47 = scmp.eq.s32.totalorder %s9, 3
    %p48 = scmp.ne.s32.totalorder %s43, %s45
    %p49 = scmp.eq.s32.totalorder %s9, 0
    %p50 = por %p48, %p49
    %p51 = scmp.ne.s32.totalorder %s43, %s45
    %p52 = scmp.eq.s32.totalorder %s14, 3
    %p53 = por %p51, %p52
    %p54 = scmp.ne.s32.totalorder %s45, %s46
    %p55 = scmp.eq.s32.totalorder %s14, 0
    %p56 = por %p54, %p55
    %p57 = scmp.ne.s32.totalorder %s45, %s46
    %p58 = scmp.eq.s32.totalorder %s15, 3
    %p59 = por %p57, %p58
    %p61 = scmp.ne.s32.totalorder %s46, %s60
    %p62 = scmp.eq.s32.totalorder %s15, 0
    %p63 = por %p61, %p62
    %s65 = sadd.s32 %s64, 1
    %p68 = scmp.eq.s32.totalorder %s9, 3
    %p69 = scmp.ne.s32.totalorder %s64, %s66
    %p70 = scmp.eq.s32.totalorder %s9, 0
    %p71 = por %p69, %p70
    %p72 = scmp.ne.s32.totalorder %s64, %s66
    %p73 = scmp.eq.s32.totalorder %s14, 3
    %p74 = por %p72, %p73
    %p75 = scmp.ne.s32.totalorder %s66, %s67
    %p76 = scmp.eq.s32.totalorder %s14, 0
    %p77 = por %p75, %p76
    %p78 = scmp.ne.s32.totalorder %s66, %s67
    %p79 = scmp.eq.s32.totalorder %s15, 3
    %p80 = por %p78, %p79
    %p82 = scmp.ne.s32.totalorder %s67, %s81
    %p83 = scmp.eq.s32.totalorder %s15, 0
    %p84 = por %p82, %p83
    %s85 = ssub.s32 %s9, %s16
    %p86 = scmp.eq.s32.totalorder %s85, 0
    %s88 = sadd.s32 %s87, 1
    %s89 = scalar_select %p86, %s87, %s88
    %p92 = pneg %p86
    %p93 = scmp.eq.s32.totalorder %s9, 3
    %p94 = por %p92, %p93
    %p95 = scmp.ne.s32.totalorder %s87, %s90
    %p96 = scmp.eq.s32.totalorder %s9, 0
    %p97 = por %p95, %p96
    %p98 = scmp.ne.s32.totalorder %s87, %s90
    %p99 = scmp.eq.s32.totalorder %s14, 3
    %p100 = por %p98, %p99
    %p101 = scmp.ne.s32.totalorder %s90, %s91
    %p102 = scmp.eq.s32.totalorder %s14, 0
    %p103 = por %p101, %p102
    %p104 = scmp.ne.s32.totalorder %s90, %s91
    %p105 = scmp.eq.s32.totalorder %s15, 3
    %p106 = por %p104, %p105
    %p108 = scmp.ne.s32.totalorder %s91, %s107
    %p109 = scmp.eq.s32.totalorder %s15, 0
    %p110 = por %p108, %p109
    %p111 = scmp.le.s32.totalorder 1, %s9
    %p112 = scmp.lt.s32.totalorder %s9, 5
    %p113 = pnand %p111, %p112
    %p114 = pneg %p113
    // Predicated region
    $region9: #{half_edge_resnet_forward.6} parent=5 // pred_check
      _
    $region10: #{half_edge_resnet_forward.6} parent=5 // pred_check_branch
      %116 = sbr.rel (%p113) target = $region12
    $region11: #{half_edge_resnet_forward.6} parent=5 // pred_region
      %s117 = ssub.s32 %s9, 1
      // Predicated region
      $region13: #{half_edge_resnet_forward.6} parent=11 // pred_check
        %p118 = pneg %p56
      $region14: #{half_edge_resnet_forward.6} parent=11 // pred_check_branch
        %120 = sbr.rel (%p118) target = $region16
      $region15: #{half_edge_resnet_forward.6} parent=11 // pred_region
        _
      $region16: #{half_edge_resnet_forward.6} parent=11 // pred_fallthru
        _
      // Predicated region
      $region17: #{half_edge_resnet_forward.6} parent=11 // pred_check
        %p121 = pneg %p77
      $region18: #{half_edge_resnet_forward.6} parent=11 // pred_check_branch
        %123 = sbr.rel (%p121) target = $region20
      $region19: #{half_edge_resnet_forward.6} parent=11 // pred_region
        _
      $region20: #{half_edge_resnet_forward.6} parent=11 // pred_fallthru
        _
    $region12: #{half_edge_resnet_forward.6} parent=5 // pred_fallthru
      _
    %p124 = scmp.lt.s32.totalorder %s9, 4
    // Predicated region
    $region21: #{half_edge_resnet_forward.6} parent=5 // pred_check
      %p125 = pneg %p124
    $region22: #{half_edge_resnet_forward.6} parent=5 // pred_check_branch
      %127 = sbr.rel (%p125) target = $region24
    $region23: #{half_edge_resnet_forward.6} parent=5 // pred_region
      // Predicated region
      $region25: #{half_edge_resnet_forward.6} parent=23 // pred_check
        %p128 = pneg %p29
      $region26: #{half_edge_resnet_forward.6} parent=23 // pred_check_branch
        %130 = sbr.rel (%p128) target = $region28
      $region27: #{half_edge_resnet_forward.6} parent=23 // pred_region
        %s131 = smul.u32 16, %s9
        %p132 = scmp.lt.s32.totalorder %s131, 63
        %s133 = scalar_select %p132, %s131, 63
        %s134 = smul.addr %s133, 4
        %s135 = scalar_lea.vmem %s0, %s134
        %s136 = smul.u32 16, %s9
      $region28: #{half_edge_resnet_forward.6} parent=23 // pred_fallthru
        _
    $region24: #{half_edge_resnet_forward.6} parent=5 // pred_fallthru
      _
    %p137 = scmp.le.s32.totalorder 1, %s9
    %p138 = scmp.lt.s32.totalorder %s9, 5
    %p139 = pnand %p137, %p138
    %p140 = pneg %p139
    // Predicated region
    $region29: #{half_edge_resnet_forward.6} parent=5 // pred_check
      _
    $region30: #{half_edge_resnet_forward.6} parent=5 // pred_check_branch
      %142 = sbr.rel (%p139) target = $region32
    $region31: #{half_edge_resnet_forward.6} parent=5 // pred_region
      %s143 = ssub.s32 %s9, 1
      %s144 = smul.u32 16, %s14
      %p145 = scmp.lt.s32.totalorder %s144, 63
      %s146 = scalar_select %p145, %s144, 63
      %s147 = smul.addr %s146, 4
      %s148 = scalar_lea.vmem %s0, %s147
      %p149 = pneg %p35
      %p150 = pneg %p32
      %p151 = pneg %p56
      %p152 = pneg %p53
      %p153 = pneg %p77
      %p154 = pneg %p74
      %p155 = pneg %p103
      %p156 = pneg %p100
      %s157 = smul.u32 16, %s14
      %p158 = scmp.lt.s32.totalorder %s157, 63
      %s159 = scalar_select %p158, %s157, 63
      %s160 = smul.addr %s159, 8
      %s161 = scalar_lea.vmem %s3, %s160
      %s162 = smul.u32 16, %s14
      %p163 = scmp.lt.s32.totalorder %s162, 63
      %s164 = scalar_select %p163, %s162, 63
      %s165 = smul.addr %s164, 4
      %s166 = scalar_lea.vmem %s0, %s165
      %s167 = smul.u32 16, %s14
      %s168 = smul.u32 16, %s14
      %p169 = scmp.lt.s32.totalorder %s168, 63
      %s170 = scalar_select %p169, %s168, 63
      %s171 = smul.addr %s170, 8
      %s172 = scalar_lea.vmem %s3, %s171
      %s173 = smul.u32 16, %s14
      %v175 = vld [vmem:[%s166] sm:$0xf]
      %v176 = vld [vmem:[%s166 + $0x4] sm:$0xf]
      %v177 = vld [vmem:[%s166 + $0x8] sm:$0xf]
      %v178 = vld [vmem:[%s166 + $0xc] sm:$0xf]
      %v179 = vld [vmem:[%s166 + $0x10] sm:$0xf]
      %v180 = vld [vmem:[%s166 + $0x14] sm:$0xf]
      %v181 = vld [vmem:[%s166 + $0x18] sm:$0xf]
      %v182 = vld [vmem:[%s166 + $0x1c] sm:$0xf]
      %v183 = vld [vmem:[%s166 + $0x20] sm:$0xf]
      %v184 = vld [vmem:[%s166 + $0x24] sm:$0xf]
      %v185 = vld [vmem:[%s166 + $0x28] sm:$0xf]
      %v186 = vld [vmem:[%s166 + $0x2c] sm:$0xf]
      %v187 = vld [vmem:[%s166 + $0x30] sm:$0xf]
      %v188 = vld [vmem:[%s166 + $0x34] sm:$0xf]
      %v189 = vld [vmem:[%s166 + $0x38] sm:$0xf]
      %v190 = vld [vmem:[%s166 + $0x3c] sm:$0xf]
      %v191 = vld [vmem:[%s1] sm:$0xf]
      %v192 = vld [vmem:[%s1 + $0x4] sm:$0xf]
      %v193 = vld [vmem:[%s1 + $0x8] sm:$0xf]
      %v194 = vld [vmem:[%s1 + $0xc] sm:$0xf]
      %v195 = vld [vmem:[%s1 + $0x10] sm:$0xf]
      %v196 = vld [vmem:[%s1 + $0x14] sm:$0xf]
      %v197 = vld [vmem:[%s1 + $0x18] sm:$0xf]
      %v198 = vld [vmem:[%s1 + $0x1c] sm:$0xf]
      %v199 = vld [vmem:[%s1 + $0x20] sm:$0xf]
      %v200 = vld [vmem:[%s1 + $0x24] sm:$0xf]
      %v201 = vld [vmem:[%s2] sm:$0x1]
      %v203 = vlaneseq
      %v204 = vshrl.u32 %v203, 7
      %v205 = vsub.s32 0, %v204
      %v206 = vrot.slane %v201, %v205
      %v224 = vunpack.c.l.b16 %v175
      %v225 = vunpack.c.l.b16 %v176
      %v226 = vunpack.c.l.b16 %v177
      %v227 = vunpack.c.l.b16 %v178
      %v228 = vunpack.c.l.b16 %v179
      %v229 = vunpack.c.l.b16 %v180
      %v230 = vunpack.c.l.b16 %v181
      %v231 = vunpack.c.l.b16 %v182
      %v232 = vunpack.c.l.b16 %v183
      %v233 = vunpack.c.l.b16 %v184
      %v234 = vunpack.c.l.b16 %v185
      %v235 = vunpack.c.l.b16 %v186
      %v236 = vunpack.c.l.b16 %v187
      %v237 = vunpack.c.l.b16 %v188
      %v238 = vunpack.c.l.b16 %v189
      %v239 = vunpack.c.l.b16 %v190
      %v240 = vpack.c.b16 %v225, %v224
      %v241 = vpack.c.b16 %v227, %v226
      %v242 = vpack.c.b16 %v229, %v228
      %v243 = vpack.c.b16 %v231, %v230
      %v244 = vpack.c.b16 %v233, %v232
      %v245 = vpack.c.b16 %v235, %v234
      %v246 = vpack.c.b16 %v237, %v236
      %v247 = vpack.c.b16 %v239, %v238
      %v258 = vunpack.c.l.b16 %v191
      %v259 = vunpack.c.l.b16 %v192
      %v260 = vunpack.c.l.b16 %v193
      %v261 = vunpack.c.l.b16 %v194
      %v262 = vunpack.c.l.b16 %v195
      %v263 = vunpack.c.l.b16 %v196
      %v264 = vunpack.c.l.b16 %v197
      %v265 = vunpack.c.l.b16 %v198
      %v266 = vunpack.c.l.b16 %v199
      %v267 = vunpack.c.l.b16 %v200
      %v268 = vpack.c.b16 %v259, %v258
      %v269 = vpack.c.b16 %v261, %v260
      %v270 = vpack.c.b16 %v263, %v262
      %v271 = vpack.c.b16 %v265, %v264
      %v272 = vpack.c.b16 %v267, %v266
      %vm278 = vcmask 654336
      %v280 = vsel %vm278, %v240, 0
      %v283 = vsel %vm278, %v241, 0
      %v286 = vsel %vm278, %v242, 0
      %v289 = vsel %vm278, %v243, 0
      %v292 = vsel %vm278, %v244, 0
      %v295 = vsel %vm278, %v245, 0
      %v298 = vsel %vm278, %v246, 0
      %v301 = vsel %vm278, %v247, 0
      %303 = vmatprep.subr.bf16.mxu0 0
      %304 = vmatpush1.bf16.msra.mxu0 %v268
      %305 = vmatprep.subr.bf16.mxu0 0
      %306 = vmatpush1.bf16.msra.mxu0 %v269
      %307 = vmatprep.subr.bf16.mxu0 0
      %308 = vmatpush1.bf16.msra.mxu0 %v270
      %309 = vmatprep.subr.bf16.mxu0 0
      %310 = vmatpush1.bf16.msra.mxu0 %v271
      %311 = vmatprep.subr.bf16.mxu0 0
      %312 = vmatpush1.bf16.msra.mxu0 %v272
      %313 = vmatprep.subr.bf16.mxu0 0
      %314 = vmatpush1.bf16.msra.mxu0 0
      %315 = vmatprep.subr.bf16.mxu0 0
      %316 = vmatpush1.bf16.msra.mxu0 0
      %317 = vmatprep.subr.bf16.mxu0 0
      %318 = vmatpush1.bf16.msra.mxu0 0
      %319 = vmatprep.subr.bf16.mxu0 0
      %320 = vmatpush1.bf16.msra.mxu0 0
      %321 = vmatprep.subr.bf16.mxu0 0
      %322 = vmatpush1.bf16.msra.mxu0 0
      %323 = vmatprep.subr.bf16.mxu0 0
      %324 = vmatpush1.bf16.msra.mxu0 0
      %325 = vmatprep.subr.bf16.mxu0 0
      %326 = vmatpush1.bf16.msra.mxu0 0
      %327 = vmatprep.subr.bf16.mxu0 0
      %328 = vmatpush1.bf16.msra.mxu0 0
      %329 = vmatprep.subr.bf16.mxu0 0
      %330 = vmatpush1.bf16.msra.mxu0 0
      %331 = vmatprep.subr.bf16.mxu0 0
      %332 = vmatpush1.bf16.msra.mxu0 0
      %333 = vmatprep.subr.bf16.mxu0 0
      %334 = vmatpush1.bf16.msra.mxu0 0
      %335 = vmatprep.mubr.bf16.mxu0 0
      %336 = vmatmul.mubr.bf16.gmra.mrb[0].mxu0 %v280
      %v337 = vpop.f32.mrb[0].mxu0
      %v338 = vadd.f32 %v206, %v337
      %v339 = vpop.f32.mrb[0].mxu0
      %v340 = vpop.f32.mrb[0].mxu0
      %v341 = vadd.f32 %v206, %v340
      %v342 = vpop.f32.mrb[0].mxu0
      %343 = vmatprep.mubr.bf16.mxu0 0
      %344 = vmatmul.mubr.bf16.gmra.mrb[0].mxu0 %v283
      %v345 = vpop.f32.mrb[0].mxu0
      %v346 = vadd.f32 %v206, %v345
      %v347 = vpop.f32.mrb[0].mxu0
      %v348 = vpop.f32.mrb[0].mxu0
      %v349 = vadd.f32 %v206, %v348
      %v350 = vpop.f32.mrb[0].mxu0
      %351 = vmatprep.mubr.bf16.mxu0 0
      %352 = vmatmul.mubr.bf16.gmra.mrb[0].mxu0 %v286
      %v353 = vpop.f32.mrb[0].mxu0
      %v354 = vadd.f32 %v206, %v353
      %v355 = vpop.f32.mrb[0].mxu0
      %v356 = vpop.f32.mrb[0].mxu0
      %v357 = vadd.f32 %v206, %v356
      %v358 = vpop.f32.mrb[0].mxu0
      %359 = vmatprep.mubr.bf16.mxu0 0
      %360 = vmatmul.mubr.bf16.gmra.mrb[0].mxu0 %v289
      %v361 = vpop.f32.mrb[0].mxu0
      %v362 = vadd.f32 %v206, %v361
      %v363 = vpop.f32.mrb[0].mxu0
      %v364 = vpop.f32.mrb[0].mxu0
      %v365 = vadd.f32 %v206, %v364
      %v366 = vpop.f32.mrb[0].mxu0
      %367 = vmatprep.mubr.bf16.mxu0 0
      %368 = vmatmul.mubr.bf16.gmra.mrb[0].mxu0 %v292
      %v369 = vpop.f32.mrb[0].mxu0
      %v370 = vadd.f32 %v206, %v369
      %v371 = vpop.f32.mrb[0].mxu0
      %v372 = vpop.f32.mrb[0].mxu0
      %v373 = vadd.f32 %v206, %v372
      %v374 = vpop.f32.mrb[0].mxu0
      %375 = vmatprep.mubr.bf16.mxu0 0
      %376 = vmatmul.mubr.bf16.gmra.mrb[0].mxu0 %v295
      %v377 = vpop.f32.mrb[0].mxu0
      %v378 = vadd.f32 %v206, %v377
      %v379 = vpop.f32.mrb[0].mxu0
      %v380 = vpop.f32.mrb[0].mxu0
      %v381 = vadd.f32 %v206, %v380
      %v382 = vpop.f32.mrb[0].mxu0
      %383 = vmatprep.mubr.bf16.mxu0 0
      %384 = vmatmul.mubr.bf16.gmra.mrb[0].mxu0 %v298
      %v385 = vpop.f32.mrb[0].mxu0
      %v386 = vadd.f32 %v206, %v385
      %v387 = vpop.f32.mrb[0].mxu0
      %v388 = vpop.f32.mrb[0].mxu0
      %v389 = vadd.f32 %v206, %v388
      %v390 = vpop.f32.mrb[0].mxu0
      %391 = vmatprep.mubr.bf16.mxu0 0
      %392 = vmatmul.mubr.bf16.gmra.mrb[0].mxu0 %v301
      %v393 = vpop.f32.mrb[0].mxu0
      %v394 = vadd.f32 %v206, %v393
      %v395 = vpop.f32.mrb[0].mxu0
      %v396 = vpop.f32.mrb[0].mxu0
      %v397 = vadd.f32 %v206, %v396
      %v398 = vpop.f32.mrb[0].mxu0
      %399 = vdwg.mxu0
      %v400 = vmax.f32 %v338, 0.0
      %v401 = vmax.f32 %v341, 0.0
      %v402 = vmax.f32 %v346, 0.0
      %v403 = vmax.f32 %v349, 0.0
      %v404 = vmax.f32 %v354, 0.0
      %v405 = vmax.f32 %v357, 0.0
      %v406 = vmax.f32 %v362, 0.0
      %v407 = vmax.f32 %v365, 0.0
      %v408 = vmax.f32 %v370, 0.0
      %v409 = vmax.f32 %v373, 0.0
      %v410 = vmax.f32 %v378, 0.0
      %v411 = vmax.f32 %v381, 0.0
      %v412 = vmax.f32 %v386, 0.0
      %v413 = vmax.f32 %v389, 0.0
      %v414 = vmax.f32 %v394, 0.0
      %v415 = vmax.f32 %v397, 0.0
      %416 = vst [vmem:[%s172] sm:$0xff] %v400
      %417 = vst [vmem:[%s172 + $0x8] sm:$0xff] %v401
      %418 = vst [vmem:[%s172 + $0x10] sm:$0xff] %v402
      %419 = vst [vmem:[%s172 + $0x18] sm:$0xff] %v403
      %420 = vst [vmem:[%s172 + $0x20] sm:$0xff] %v404
      %421 = vst [vmem:[%s172 + $0x28] sm:$0xff] %v405
      %422 = vst [vmem:[%s172 + $0x30] sm:$0xff] %v406
      %423 = vst [vmem:[%s172 + $0x38] sm:$0xff] %v407
      %424 = vst [vmem:[%s172 + $0x40] sm:$0xff] %v408
      %425 = vst [vmem:[%s172 + $0x48] sm:$0xff] %v409
      %426 = vst [vmem:[%s172 + $0x50] sm:$0xff] %v410
      %427 = vst [vmem:[%s172 + $0x58] sm:$0xff] %v411
      %428 = vst [vmem:[%s172 + $0x60] sm:$0xff] %v412
      %429 = vst [vmem:[%s172 + $0x68] sm:$0xff] %v413
      %430 = vst [vmem:[%s172 + $0x70] sm:$0xff] %v414
      %431 = vst [vmem:[%s172 + $0x78] sm:$0xff] %v415
      %s432 = smul.u32 16, %s14
      %p433 = scmp.lt.s32.totalorder %s432, 63
      %s434 = scalar_select %p433, %s432, 63
      %s435 = smul.addr %s434, 8
      %s436 = scalar_lea.vmem %s3, %s435
      // Predicated region
      $region33: #{half_edge_resnet_forward.6} parent=31 // pred_check
        %p437 = pneg %p100
      $region34: #{half_edge_resnet_forward.6} parent=31 // pred_check_branch
        %439 = sbr.rel (%p437) target = $region36
      $region35: #{half_edge_resnet_forward.6} parent=31 // pred_region
        %s440 = smul.u32 16, %s14
      $region36: #{half_edge_resnet_forward.6} parent=31 // pred_fallthru
        _
    $region32: #{half_edge_resnet_forward.6} parent=5 // pred_fallthru
      _
    %p441 = scmp.le.s32.totalorder 2, %s9
    // Predicated region
    $region37: #{half_edge_resnet_forward.6} parent=5 // pred_check
      %p442 = pneg %p441
    $region38: #{half_edge_resnet_forward.6} parent=5 // pred_check_branch
      %444 = sbr.rel (%p442) target = $region40
    $region39: #{half_edge_resnet_forward.6} parent=5 // pred_region
      %s445 = ssub.s32 %s9, 2
      // Predicated region
      $region41: #{half_edge_resnet_forward.6} parent=39 // pred_check
        %p446 = pneg %p106
      $region42: #{half_edge_resnet_forward.6} parent=39 // pred_check_branch
        %448 = sbr.rel (%p446) target = $region44
      $region43: #{half_edge_resnet_forward.6} parent=39 // pred_region
        %s449 = smul.u32 16, %s15
        %p450 = scmp.lt.s32.totalorder %s449, 63
        %s451 = scalar_select %p450, %s449, 63
        %s452 = smul.addr %s451, 8
        %s453 = scalar_lea.vmem %s3, %s452
      $region44: #{half_edge_resnet_forward.6} parent=39 // pred_fallthru
        _
    $region40: #{half_edge_resnet_forward.6} parent=5 // pred_fallthru
      _
  $region6: #{half_edge_resnet_forward.6} parent=0 // loop_footer
    %s13 = sadd.s32 1, %s9
  $region7: #{half_edge_resnet_forward.6} parent=0 // loop_footer_branch
    %8 = sbr.rel target = $region3
  $region8: #{half_edge_resnet_forward.6} parent=0 // loop_exit
    _

// kernel: half_edge_resnet_forward.7
$region0: #{half_edge_resnet_forward.7}
  #allocation0 [shape = 'u32[]', space=smem, size = 0x4, offset = 0x4, fixed_abs, tag = 'smem constant byte address 0x4 - core index']
  #allocation1 [shape = 'u32[144,128]{1,0:T(1,128)}', space=vmem, size = 0x12000, scoped, tag = 'internal scratch']
  %s0 = inlined_call_operand.vmem [shape: bf16[512,512], index: 0, kind: input, shape index: {}]
  %s1 = inlined_call_operand.vmem [shape: bf16[512,128], index: 1, kind: input, shape index: {}]
  %s2 = inlined_call_operand.vmem [shape: f32[1,128], index: 2, kind: input, shape index: {}]
  %s3 = inlined_call_operand.vmem [shape: f32[512,128], index: 3, kind: output, shape index: {}]
  %s4 = sld [smem:[#allocation0]]
  $region45: #{half_edge_resnet_forward.7} parent=0
    _
  %s6 = ssub.s32 1, %s4
  %s7 = scalar_select 0, %s6, %s4
  loop: start=0, step=1, limit=6
  $region2: #{half_edge_resnet_forward.7} parent=0 // loop_pre_header
    _
  $region3: #{half_edge_resnet_forward.7} parent=0 // loop_header
    %s9 = sphi 0, %s13
    %p10 = scmp.ge.s32.totalorder %s9, 6
    %s19 = sphi 0, %s21
    %s22 = sphi 0, %s19
    %s23 = sphi 0, %s22
    %s39 = sphi 0, %s23
    %s43 = sphi 0, %s43
    %s45 = sphi 0, %s43
    %s46 = sphi 0, %s45
    %s60 = sphi 0, %s46
    %s64 = sphi 0, %s64
    %s66 = sphi 0, %s64
    %s67 = sphi 0, %s66
    %s81 = sphi 0, %s67
    %s87 = sphi 0, %s89
    %s90 = sphi 0, %s87
    %s91 = sphi 0, %s90
    %s107 = sphi 0, %s91
  $region4: #{half_edge_resnet_forward.7} parent=0 // loop_header_branch
    %12 = sbr.rel (%p10) target = $region8
  $region5: #{half_edge_resnet_forward.7} parent=0 // loop_body
    %s14 = ssub.s32 %s9, 1
    %s15 = ssub.s32 %s9, 2
    %s16 = sadd.s32 %s9, 1
    %s17 = ssub.s32 %s9, %s16
    %p18 = scmp.eq.s32.totalorder %s17, 0
    %s20 = sadd.s32 %s19, 1
    %s21 = scalar_select %p18, %s19, %s20
    %p24 = pneg %p18
    %p25 = scmp.eq.s32.totalorder %s9, 3
    %p26 = por %p24, %p25
    %p27 = scmp.ne.s32.totalorder %s19, %s22
    %p28 = scmp.eq.s32.totalorder %s9, 0
    %p29 = por %p27, %p28
    %p30 = scmp.ne.s32.totalorder %s19, %s22
    %p31 = scmp.eq.s32.totalorder %s14, 3
    %p32 = por %p30, %p31
    %p33 = scmp.ne.s32.totalorder %s22, %s23
    %p34 = scmp.eq.s32.totalorder %s14, 0
    %p35 = por %p33, %p34
    %p36 = scmp.ne.s32.totalorder %s22, %s23
    %p37 = scmp.eq.s32.totalorder %s15, 3
    %p38 = por %p36, %p37
    %p40 = scmp.ne.s32.totalorder %s23, %s39
    %p41 = scmp.eq.s32.totalorder %s15, 0
    %p42 = por %p40, %p41
    %s44 = sadd.s32 %s43, 1
    %p47 = scmp.eq.s32.totalorder %s9, 3
    %p48 = scmp.ne.s32.totalorder %s43, %s45
    %p49 = scmp.eq.s32.totalorder %s9, 0
    %p50 = por %p48, %p49
    %p51 = scmp.ne.s32.totalorder %s43, %s45
    %p52 = scmp.eq.s32.totalorder %s14, 3
    %p53 = por %p51, %p52
    %p54 = scmp.ne.s32.totalorder %s45, %s46
    %p55 = scmp.eq.s32.totalorder %s14, 0
    %p56 = por %p54, %p55
    %p57 = scmp.ne.s32.totalorder %s45, %s46
    %p58 = scmp.eq.s32.totalorder %s15, 3
    %p59 = por %p57, %p58
    %p61 = scmp.ne.s32.totalorder %s46, %s60
    %p62 = scmp.eq.s32.totalorder %s15, 0
    %p63 = por %p61, %p62
    %s65 = sadd.s32 %s64, 1
    %p68 = scmp.eq.s32.totalorder %s9, 3
    %p69 = scmp.ne.s32.totalorder %s64, %s66
    %p70 = scmp.eq.s32.totalorder %s9, 0
    %p71 = por %p69, %p70
    %p72 = scmp.ne.s32.totalorder %s64, %s66
    %p73 = scmp.eq.s32.totalorder %s14, 3
    %p74 = por %p72, %p73
    %p75 = scmp.ne.s32.totalorder %s66, %s67
    %p76 = scmp.eq.s32.totalorder %s14, 0
    %p77 = por %p75, %p76
    %p78 = scmp.ne.s32.totalorder %s66, %s67
    %p79 = scmp.eq.s32.totalorder %s15, 3
    %p80 = por %p78, %p79
    %p82 = scmp.ne.s32.totalorder %s67, %s81
    %p83 = scmp.eq.s32.totalorder %s15, 0
    %p84 = por %p82, %p83
    %s85 = ssub.s32 %s9, %s16
    %p86 = scmp.eq.s32.totalorder %s85, 0
    %s88 = sadd.s32 %s87, 1
    %s89 = scalar_select %p86, %s87, %s88
    %p92 = pneg %p86
    %p93 = scmp.eq.s32.totalorder %s9, 3
    %p94 = por %p92, %p93
    %p95 = scmp.ne.s32.totalorder %s87, %s90
    %p96 = scmp.eq.s32.totalorder %s9, 0
    %p97 = por %p95, %p96
    %p98 = scmp.ne.s32.totalorder %s87, %s90
    %p99 = scmp.eq.s32.totalorder %s14, 3
    %p100 = por %p98, %p99
    %p101 = scmp.ne.s32.totalorder %s90, %s91
    %p102 = scmp.eq.s32.totalorder %s14, 0
    %p103 = por %p101, %p102
    %p104 = scmp.ne.s32.totalorder %s90, %s91
    %p105 = scmp.eq.s32.totalorder %s15, 3
    %p106 = por %p104, %p105
    %p108 = scmp.ne.s32.totalorder %s91, %s107
    %p109 = scmp.eq.s32.totalorder %s15, 0
    %p110 = por %p108, %p109
    %p111 = scmp.le.s32.totalorder 1, %s9
    %p112 = scmp.lt.s32.totalorder %s9, 5
    %p113 = pnand %p111, %p112
    %p114 = pneg %p113
    // Predicated region
    $region9: #{half_edge_resnet_forward.7} parent=5 // pred_check
      _
    $region10: #{half_edge_resnet_forward.7} parent=5 // pred_check_branch
      %116 = sbr.rel (%p113) target = $region12
    $region11: #{half_edge_resnet_forward.7} parent=5 // pred_region
      %s117 = ssub.s32 %s9, 1
      // Predicated region
      $region13: #{half_edge_resnet_forward.7} parent=11 // pred_check
        %p118 = pneg %p56
      $region14: #{half_edge_resnet_forward.7} parent=11 // pred_check_branch
        %120 = sbr.rel (%p118) target = $region16
      $region15: #{half_edge_resnet_forward.7} parent=11 // pred_region
        _
      $region16: #{half_edge_resnet_forward.7} parent=11 // pred_fallthru
        _
      // Predicated region
      $region17: #{half_edge_resnet_forward.7} parent=11 // pred_check
        %p121 = pneg %p77
      $region18: #{half_edge_resnet_forward.7} parent=11 // pred_check_branch
        %123 = sbr.rel (%p121) target = $region20
      $region19: #{half_edge_resnet_forward.7} parent=11 // pred_region
        _
      $region20: #{half_edge_resnet_forward.7} parent=11 // pred_fallthru
        _
    $region12: #{half_edge_resnet_forward.7} parent=5 // pred_fallthru
      _
    %p124 = scmp.lt.s32.totalorder %s9, 4
    // Predicated region
    $region21: #{half_edge_resnet_forward.7} parent=5 // pred_check
      %p125 = pneg %p124
    $region22: #{half_edge_resnet_forward.7} parent=5 // pred_check_branch
      %127 = sbr.rel (%p125) target = $region24
    $region23: #{half_edge_resnet_forward.7} parent=5 // pred_region
      // Predicated region
      $region25: #{half_edge_resnet_forward.7} parent=23 // pred_check
        %p128 = pneg %p29
      $region26: #{half_edge_resnet_forward.7} parent=23 // pred_check_branch
        %130 = sbr.rel (%p128) target = $region28
      $region27: #{half_edge_resnet_forward.7} parent=23 // pred_region
        %s131 = smul.u32 16, %s9
        %p132 = scmp.lt.s32.totalorder %s131, 63
        %s133 = scalar_select %p132, %s131, 63
        %s134 = smul.addr %s133, 4
        %s135 = smul.addr %s134, 4
        %s136 = scalar_lea.vmem %s0, %s135
        %s137 = smul.u32 16, %s9
      $region28: #{half_edge_resnet_forward.7} parent=23 // pred_fallthru
        _
    $region24: #{half_edge_resnet_forward.7} parent=5 // pred_fallthru
      _
    %p138 = scmp.le.s32.totalorder 1, %s9
    %p139 = scmp.lt.s32.totalorder %s9, 5
    %p140 = pnand %p138, %p139
    %p141 = pneg %p140
    // Predicated region
    $region29: #{half_edge_resnet_forward.7} parent=5 // pred_check
      _
    $region30: #{half_edge_resnet_forward.7} parent=5 // pred_check_branch
      %143 = sbr.rel (%p140) target = $region32
    $region31: #{half_edge_resnet_forward.7} parent=5 // pred_region
      %s144 = ssub.s32 %s9, 1
      %s145 = smul.u32 16, %s14
      %p146 = scmp.lt.s32.totalorder %s145, 63
      %s147 = scalar_select %p146, %s145, 63
      %s148 = smul.addr %s147, 4
      %s149 = smul.addr %s148, 4
      %s150 = scalar_lea.vmem %s0, %s149
      %p151 = pneg %p35
      %p152 = pneg %p32
      %p153 = pneg %p56
      %p154 = pneg %p53
      %p155 = pneg %p77
      %p156 = pneg %p74
      %p157 = pneg %p103
      %p158 = pneg %p100
      %s159 = smul.u32 16, %s14
      %p160 = scmp.lt.s32.totalorder %s159, 63
      %s161 = scalar_select %p160, %s159, 63
      %s162 = smul.addr %s161, 8
      %s163 = scalar_lea.vmem %s3, %s162
      %s164 = smul.u32 16, %s14
      %p165 = scmp.lt.s32.totalorder %s164, 63
      %s166 = scalar_select %p165, %s164, 63
      %s167 = smul.addr %s166, 4
      %s168 = smul.addr %s167, 4
      %s169 = scalar_lea.vmem %s0, %s168
      %s170 = smul.u32 16, %s14
      %s171 = smul.u32 16, %s14
      %p172 = scmp.lt.s32.totalorder %s171, 63
      %s173 = scalar_select %p172, %s171, 63
      %s174 = smul.addr %s173, 8
      %s175 = scalar_lea.vmem %s3, %s174
      %s176 = smul.u32 16, %s14
      %v178 = vld [vmem:[%s169] sm:$0xff]
      %v179 = vld [vmem:[%s169 + $0x8] sm:$0xff]
      %v180 = vld [vmem:[%s169 + $0x10] sm:$0xff]
      %v181 = vld [vmem:[%s169 + $0x18] sm:$0xff]
      %v182 = vld [vmem:[%s169 + $0x20] sm:$0xff]
      %v183 = vld [vmem:[%s169 + $0x28] sm:$0xff]
      %v184 = vld [vmem:[%s169 + $0x30] sm:$0xff]
      %v185 = vld [vmem:[%s169 + $0x38] sm:$0xff]
      %v186 = vld [vmem:[%s169 + $0x40] sm:$0xff]
      %v187 = vld [vmem:[%s169 + $0x48] sm:$0xff]
      %v188 = vld [vmem:[%s169 + $0x50] sm:$0xff]
      %v189 = vld [vmem:[%s169 + $0x58] sm:$0xff]
      %v190 = vld [vmem:[%s169 + $0x60] sm:$0xff]
      %v191 = vld [vmem:[%s169 + $0x68] sm:$0xff]
      %v192 = vld [vmem:[%s169 + $0x70] sm:$0xff]
      %v193 = vld [vmem:[%s169 + $0x78] sm:$0xff]
      %v194 = vld [vmem:[%s169 + $0x80] sm:$0xff]
      %v195 = vld [vmem:[%s169 + $0x88] sm:$0xff]
      %v196 = vld [vmem:[%s169 + $0x90] sm:$0xff]
      %v197 = vld [vmem:[%s169 + $0x98] sm:$0xff]
      %v198 = vld [vmem:[%s169 + $0xa0] sm:$0xff]
      %v199 = vld [vmem:[%s169 + $0xa8] sm:$0xff]
      %v200 = vld [vmem:[%s169 + $0xb0] sm:$0xff]
      %v201 = vld [vmem:[%s169 + $0xb8] sm:$0xff]
      %v202 = vld [vmem:[%s169 + $0xc0] sm:$0xff]
      %v203 = vld [vmem:[%s169 + $0xc8] sm:$0xff]
      %v204 = vld [vmem:[%s169 + $0xd0] sm:$0xff]
      %v205 = vld [vmem:[%s169 + $0xd8] sm:$0xff]
      %v206 = vld [vmem:[%s169 + $0xe0] sm:$0xff]
      %v207 = vld [vmem:[%s169 + $0xe8] sm:$0xff]
      %v208 = vld [vmem:[%s169 + $0xf0] sm:$0xff]
      %v209 = vld [vmem:[%s169 + $0xf8] sm:$0xff]
      %v210 = vld [vmem:[%s1] sm:$0xf]
      %v211 = vld [vmem:[%s1 + $0x4] sm:$0xf]
      %v212 = vld [vmem:[%s1 + $0x8] sm:$0xf]
      %v213 = vld [vmem:[%s1 + $0xc] sm:$0xf]
      %v214 = vld [vmem:[%s1 + $0x10] sm:$0xf]
      %v215 = vld [vmem:[%s1 + $0x14] sm:$0xf]
      %v216 = vld [vmem:[%s1 + $0x18] sm:$0xf]
      %v217 = vld [vmem:[%s1 + $0x1c] sm:$0xf]
      %v218 = vld [vmem:[%s1 + $0x20] sm:$0xf]
      %v219 = vld [vmem:[%s1 + $0x24] sm:$0xf]
      %v220 = vld [vmem:[%s1 + $0x28] sm:$0xf]
      %v221 = vld [vmem:[%s1 + $0x2c] sm:$0xf]
      %v222 = vld [vmem:[%s1 + $0x30] sm:$0xf]
      %v223 = vld [vmem:[%s1 + $0x34] sm:$0xf]
      %v224 = vld [vmem:[%s1 + $0x38] sm:$0xf]
      %v225 = vld [vmem:[%s1 + $0x3c] sm:$0xf]
      %v226 = vld [vmem:[%s1 + $0x40] sm:$0xf]
      %v227 = vld [vmem:[%s1 + $0x44] sm:$0xf]
      %v228 = vld [vmem:[%s1 + $0x48] sm:$0xf]
      %v229 = vld [vmem:[%s1 + $0x4c] sm:$0xf]
      %v230 = vld [vmem:[%s1 + $0x50] sm:$0xf]
      %v231 = vld [vmem:[%s1 + $0x54] sm:$0xf]
      %v232 = vld [vmem:[%s1 + $0x58] sm:$0xf]
      %v233 = vld [vmem:[%s1 + $0x5c] sm:$0xf]
      %v234 = vld [vmem:[%s1 + $0x60] sm:$0xf]
      %v235 = vld [vmem:[%s1 + $0x64] sm:$0xf]
      %v236 = vld [vmem:[%s1 + $0x68] sm:$0xf]
      %v237 = vld [vmem:[%s1 + $0x6c] sm:$0xf]
      %v238 = vld [vmem:[%s1 + $0x70] sm:$0xf]
      %v239 = vld [vmem:[%s1 + $0x74] sm:$0xf]
      %v240 = vld [vmem:[%s1 + $0x78] sm:$0xf]
      %v241 = vld [vmem:[%s1 + $0x7c] sm:$0xf]
      %v242 = vld [vmem:[%s1 + $0x80] sm:$0xf]
      %v243 = vld [vmem:[%s1 + $0x84] sm:$0xf]
      %v244 = vld [vmem:[%s1 + $0x88] sm:$0xf]
      %v245 = vld [vmem:[%s1 + $0x8c] sm:$0xf]
      %v246 = vld [vmem:[%s1 + $0x90] sm:$0xf]
      %v247 = vld [vmem:[%s1 + $0x94] sm:$0xf]
      %v248 = vld [vmem:[%s1 + $0x98] sm:$0xf]
      %v249 = vld [vmem:[%s1 + $0x9c] sm:$0xf]
      %v250 = vld [vmem:[%s1 + $0xa0] sm:$0xf]
      %v251 = vld [vmem:[%s1 + $0xa4] sm:$0xf]
      %v252 = vld [vmem:[%s1 + $0xa8] sm:$0xf]
      %v253 = vld [vmem:[%s1 + $0xac] sm:$0xf]
      %v254 = vld [vmem:[%s1 + $0xb0] sm:$0xf]
      %v255 = vld [vmem:[%s1 + $0xb4] sm:$0xf]
      %v256 = vld [vmem:[%s1 + $0xb8] sm:$0xf]
      %v257 = vld [vmem:[%s1 + $0xbc] sm:$0xf]
      %v258 = vld [vmem:[%s1 + $0xc0] sm:$0xf]
      %v259 = vld [vmem:[%s1 + $0xc4] sm:$0xf]
      %v260 = vld [vmem:[%s1 + $0xc8] sm:$0xf]
      %v261 = vld [vmem:[%s1 + $0xcc] sm:$0xf]
      %v262 = vld [vmem:[%s1 + $0xd0] sm:$0xf]
      %v263 = vld [vmem:[%s1 + $0xd4] sm:$0xf]
      %v264 = vld [vmem:[%s1 + $0xd8] sm:$0xf]
      %v265 = vld [vmem:[%s1 + $0xdc] sm:$0xf]
      %v266 = vld [vmem:[%s1 + $0xe0] sm:$0xf]
      %v267 = vld [vmem:[%s1 + $0xe4] sm:$0xf]
      %v268 = vld [vmem:[%s1 + $0xe8] sm:$0xf]
      %v269 = vld [vmem:[%s1 + $0xec] sm:$0xf]
      %v270 = vld [vmem:[%s1 + $0xf0] sm:$0xf]
      %v271 = vld [vmem:[%s1 + $0xf4] sm:$0xf]
      %v272 = vld [vmem:[%s1 + $0xf8] sm:$0xf]
      %v273 = vld [vmem:[%s1 + $0xfc] sm:$0xf]
      %v274 = vld [vmem:[%s2] sm:$0x1]
      %v276 = vlaneseq
      %v277 = vshrl.u32 %v276, 7
      %v278 = vsub.s32 0, %v277
      %v279 = vrot.slane %v274, %v278
      %v313 = vunpack.c.l.b16 %v178
      %v314 = vunpack.c.h.b16 %v178
      %v315 = vunpack.c.l.b16 %v179
      %v316 = vunpack.c.h.b16 %v179
      %v317 = vunpack.c.l.b16 %v180
      %v318 = vunpack.c.h.b16 %v180
      %v319 = vunpack.c.l.b16 %v181
      %v320 = vunpack.c.h.b16 %v181
      %v321 = vunpack.c.l.b16 %v182
      %v322 = vunpack.c.h.b16 %v182
      %v323 = vunpack.c.l.b16 %v183
      %v324 = vunpack.c.h.b16 %v183
      %v325 = vunpack.c.l.b16 %v184
      %v326 = vunpack.c.h.b16 %v184
      %v327 = vunpack.c.l.b16 %v185
      %v328 = vunpack.c.h.b16 %v185
      %v329 = vunpack.c.l.b16 %v186
      %v330 = vunpack.c.h.b16 %v186
      %v331 = vunpack.c.l.b16 %v187
      %v332 = vunpack.c.h.b16 %v187
      %v333 = vunpack.c.l.b16 %v188
      %v334 = vunpack.c.h.b16 %v188
      %v335 = vunpack.c.l.b16 %v189
      %v336 = vunpack.c.h.b16 %v189
      %v337 = vunpack.c.l.b16 %v190
      %v338 = vunpack.c.h.b16 %v190
      %v339 = vunpack.c.l.b16 %v191
      %v340 = vunpack.c.h.b16 %v191
      %v341 = vunpack.c.l.b16 %v192
      %v342 = vunpack.c.h.b16 %v192
      %v343 = vunpack.c.l.b16 %v193
      %v344 = vunpack.c.h.b16 %v193
      %v345 = vunpack.c.l.b16 %v194
      %v346 = vunpack.c.h.b16 %v194
      %v347 = vunpack.c.l.b16 %v195
      %v348 = vunpack.c.h.b16 %v195
      %v349 = vunpack.c.l.b16 %v196
      %v350 = vunpack.c.h.b16 %v196
      %v351 = vunpack.c.l.b16 %v197
      %v352 = vunpack.c.h.b16 %v197
      %v353 = vunpack.c.l.b16 %v198
      %v354 = vunpack.c.h.b16 %v198
      %v355 = vunpack.c.l.b16 %v199
      %v356 = vunpack.c.h.b16 %v199
      %v357 = vunpack.c.l.b16 %v200
      %v358 = vunpack.c.h.b16 %v200
      %v359 = vunpack.c.l.b16 %v201
      %v360 = vunpack.c.h.b16 %v201
      %v361 = vunpack.c.l.b16 %v202
      %v362 = vunpack.c.h.b16 %v202
      %v363 = vunpack.c.l.b16 %v203
      %v364 = vunpack.c.h.b16 %v203
      %v365 = vunpack.c.l.b16 %v204
      %v366 = vunpack.c.h.b16 %v204
      %v367 = vunpack.c.l.b16 %v205
      %v368 = vunpack.c.h.b16 %v205
      %v369 = vunpack.c.l.b16 %v206
      %v370 = vunpack.c.h.b16 %v206
      %v371 = vunpack.c.l.b16 %v207
      %v372 = vunpack.c.h.b16 %v207
      %v373 = vunpack.c.l.b16 %v208
      %v374 = vunpack.c.h.b16 %v208
      %v375 = vunpack.c.l.b16 %v209
      %v376 = vunpack.c.h.b16 %v209
      %v377 = vpack.c.b16 %v317, %v313
      %v378 = vpack.c.b16 %v318, %v314
      %v379 = vpack.c.b16 %v319, %v315
      %v380 = vpack.c.b16 %v320, %v316
      %v381 = vpack.c.b16 %v325, %v321
      %v382 = vpack.c.b16 %v326, %v322
      %v383 = vpack.c.b16 %v327, %v323
      %v384 = vpack.c.b16 %v328, %v324
      %v385 = vpack.c.b16 %v333, %v329
      %v386 = vpack.c.b16 %v334, %v330
      %v387 = vpack.c.b16 %v335, %v331
      %v388 = vpack.c.b16 %v336, %v332
      %v389 = vpack.c.b16 %v341, %v337
      %v390 = vpack.c.b16 %v342, %v338
      %v391 = vpack.c.b16 %v343, %v339
      %v392 = vpack.c.b16 %v344, %v340
      %v393 = vpack.c.b16 %v349, %v345
      %v394 = vpack.c.b16 %v350, %v346
      %v395 = vpack.c.b16 %v351, %v347
      %v396 = vpack.c.b16 %v352, %v348
      %v397 = vpack.c.b16 %v357, %v353
      %v398 = vpack.c.b16 %v358, %v354
      %v399 = vpack.c.b16 %v359, %v355
      %v400 = vpack.c.b16 %v360, %v356
      %v401 = vpack.c.b16 %v365, %v361
      %v402 = vpack.c.b16 %v366, %v362
      %v403 = vpack.c.b16 %v367, %v363
      %v404 = vpack.c.b16 %v368, %v364
      %v405 = vpack.c.b16 %v373, %v369
      %v406 = vpack.c.b16 %v374, %v370
      %v407 = vpack.c.b16 %v375, %v371
      %v408 = vpack.c.b16 %v376, %v372
      %v505 = vunpack.c.l.b16 %v210
      %v506 = vunpack.c.l.b16 %v211
      %v507 = vunpack.c.l.b16 %v212
      %v508 = vunpack.c.l.b16 %v213
      %v509 = vunpack.c.l.b16 %v214
      %v510 = vunpack.c.l.b16 %v215
      %v511 = vunpack.c.l.b16 %v216
      %v512 = vunpack.c.l.b16 %v217
      %v513 = vunpack.c.l.b16 %v218
      %v514 = vunpack.c.l.b16 %v219
      %v515 = vunpack.c.l.b16 %v220
      %v516 = vunpack.c.l.b16 %v221
      %v517 = vunpack.c.l.b16 %v222
      %v518 = vunpack.c.l.b16 %v223
      %v519 = vunpack.c.l.b16 %v224
      %v520 = vunpack.c.l.b16 %v225
      %v521 = vunpack.c.l.b16 %v226
      %v522 = vunpack.c.l.b16 %v227
      %v523 = vunpack.c.l.b16 %v228
      %v524 = vunpack.c.l.b16 %v229
      %v525 = vunpack.c.l.b16 %v230
      %v526 = vunpack.c.l.b16 %v231
      %v527 = vunpack.c.l.b16 %v232
      %v528 = vunpack.c.l.b16 %v233
      %v529 = vunpack.c.l.b16 %v234
      %v530 = vunpack.c.l.b16 %v235
      %v531 = vunpack.c.l.b16 %v236
      %v532 = vunpack.c.l.b16 %v237
      %v533 = vunpack.c.l.b16 %v238
      %v534 = vunpack.c.l.b16 %v239
      %v535 = vunpack.c.l.b16 %v240
      %v536 = vunpack.c.l.b16 %v241
      %v537 = vunpack.c.l.b16 %v242
      %v538 = vunpack.c.l.b16 %v243
      %v539 = vunpack.c.l.b16 %v244
      %v540 = vunpack.c.l.b16 %v245
      %v541 = vunpack.c.l.b16 %v246
      %v542 = vunpack.c.l.b16 %v247
      %v543 = vunpack.c.l.b16 %v248
      %v544 = vunpack.c.l.b16 %v249
      %v545 = vunpack.c.l.b16 %v250
      %v546 = vunpack.c.l.b16 %v251
      %v547 = vunpack.c.l.b16 %v252
      %v548 = vunpack.c.l.b16 %v253
      %v549 = vunpack.c.l.b16 %v254
      %v550 = vunpack.c.l.b16 %v255
      %v551 = vunpack.c.l.b16 %v256
      %v552 = vunpack.c.l.b16 %v257
      %v553 = vunpack.c.l.b16 %v258
      %v554 = vunpack.c.l.b16 %v259
      %v555 = vunpack.c.l.b16 %v260
      %v556 = vunpack.c.l.b16 %v261
      %v557 = vunpack.c.l.b16 %v262
      %v558 = vunpack.c.l.b16 %v263
      %v559 = vunpack.c.l.b16 %v264
      %v560 = vunpack.c.l.b16 %v265
      %v561 = vunpack.c.l.b16 %v266
      %v562 = vunpack.c.l.b16 %v267
      %v563 = vunpack.c.l.b16 %v268
      %v564 = vunpack.c.l.b16 %v269
      %v565 = vunpack.c.l.b16 %v270
      %v566 = vunpack.c.l.b16 %v271
      %v567 = vunpack.c.l.b16 %v272
      %v568 = vunpack.c.l.b16 %v273
      %v569 = vpack.c.b16 %v506, %v505
      %v570 = vpack.c.b16 %v508, %v507
      %v571 = vpack.c.b16 %v510, %v509
      %v572 = vpack.c.b16 %v512, %v511
      %v573 = vpack.c.b16 %v514, %v513
      %v574 = vpack.c.b16 %v516, %v515
      %v575 = vpack.c.b16 %v518, %v517
      %v576 = vpack.c.b16 %v520, %v519
      %v577 = vpack.c.b16 %v522, %v521
      %v578 = vpack.c.b16 %v524, %v523
      %v579 = vpack.c.b16 %v526, %v525
      %v580 = vpack.c.b16 %v528, %v527
      %v581 = vpack.c.b16 %v530, %v529
      %v582 = vpack.c.b16 %v532, %v531
      %v583 = vpack.c.b16 %v534, %v533
      %v584 = vpack.c.b16 %v536, %v535
      %v585 = vpack.c.b16 %v538, %v537
      %v586 = vpack.c.b16 %v540, %v539
      %v587 = vpack.c.b16 %v542, %v541
      %v588 = vpack.c.b16 %v544, %v543
      %v589 = vpack.c.b16 %v546, %v545
      %v590 = vpack.c.b16 %v548, %v547
      %v591 = vpack.c.b16 %v550, %v549
      %v592 = vpack.c.b16 %v552, %v551
      %v593 = vpack.c.b16 %v554, %v553
      %v594 = vpack.c.b16 %v556, %v555
      %v595 = vpack.c.b16 %v558, %v557
      %v596 = vpack.c.b16 %v560, %v559
      %v597 = vpack.c.b16 %v562, %v561
      %v598 = vpack.c.b16 %v564, %v563
      %v599 = vpack.c.b16 %v566, %v565
      %v600 = vpack.c.b16 %v568, %v567
      %633 = vmatprep.subr.bf16.mxu0 0
      %634 = vmatpush1.bf16.msra.mxu0 %v569
      %635 = vmatprep.subr.bf16.mxu0 0
      %636 = vmatpush1.bf16.msra.mxu0 %v570
      %637 = vmatprep.subr.bf16.mxu0 0
      %638 = vmatpush1.bf16.msra.mxu0 %v571
      %639 = vmatprep.subr.bf16.mxu0 0
      %640 = vmatpush1.bf16.msra.mxu0 %v572
      %641 = vmatprep.subr.bf16.mxu0 0
      %642 = vmatpush1.bf16.msra.mxu0 %v573
      %643 = vmatprep.subr.bf16.mxu0 0
      %644 = vmatpush1.bf16.msra.mxu0 %v574
      %645 = vmatprep.subr.bf16.mxu0 0
      %646 = vmatpush1.bf16.msra.mxu0 %v575
      %647 = vmatprep.subr.bf16.mxu0 0
      %648 = vmatpush1.bf16.msra.mxu0 %v576
      %649 = vmatprep.subr.bf16.mxu0 0
      %650 = vmatpush1.bf16.msra.mxu0 %v577
      %651 = vmatprep.subr.bf16.mxu0 0
      %652 = vmatpush1.bf16.msra.mxu0 %v578
      %653 = vmatprep.subr.bf16.mxu0 0
      %654 = vmatpush1.bf16.msra.mxu0 %v579
      %655 = vmatprep.subr.bf16.mxu0 0
      %656 = vmatpush1.bf16.msra.mxu0 %v580
      %657 = vmatprep.subr.bf16.mxu0 0
      %658 = vmatpush1.bf16.msra.mxu0 %v581
      %659 = vmatprep.subr.bf16.mxu0 0
      %660 = vmatpush1.bf16.msra.mxu0 %v582
      %661 = vmatprep.subr.bf16.mxu0 0
      %662 = vmatpush1.bf16.msra.mxu0 %v583
      %663 = vmatprep.subr.bf16.mxu0 0
      %664 = vmatpush1.bf16.msra.mxu0 %v584
      %665 = vmatprep.mubr.bf16.mxu0 %v378
      %666 = vmatmul.mubr.bf16.gmra.mrb[0].mxu0 %v377
      %v667 = vpop.f32.mrb[0].mxu0
      %v668 = vadd.f32 %v279, %v667
      %v669 = vpop.f32.mrb[0].mxu0
      %v670 = vpop.f32.mrb[0].mxu0
      %v671 = vadd.f32 %v279, %v670
      %v672 = vpop.f32.mrb[0].mxu0
      %673 = vmatprep.mubr.bf16.mxu0 %v382
      %674 = vmatmul.mubr.bf16.gmra.mrb[0].mxu0 %v381
      %v675 = vpop.f32.mrb[0].mxu0
      %v676 = vadd.f32 %v279, %v675
      %v677 = vpop.f32.mrb[0].mxu0
      %v678 = vpop.f32.mrb[0].mxu0
      %v679 = vadd.f32 %v279, %v678
      %v680 = vpop.f32.mrb[0].mxu0
      %681 = vmatprep.mubr.bf16.mxu0 %v386
      %682 = vmatmul.mubr.bf16.gmra.mrb[0].mxu0 %v385
      %v683 = vpop.f32.mrb[0].mxu0
      %v684 = vadd.f32 %v279, %v683
      %v685 = vpop.f32.mrb[0].mxu0
      %v686 = vpop.f32.mrb[0].mxu0
      %v687 = vadd.f32 %v279, %v686
      %v688 = vpop.f32.mrb[0].mxu0
      %689 = vmatprep.mubr.bf16.mxu0 %v390
      %690 = vmatmul.mubr.bf16.gmra.mrb[0].mxu0 %v389
      %v691 = vpop.f32.mrb[0].mxu0
      %v692 = vadd.f32 %v279, %v691
      %v693 = vpop.f32.mrb[0].mxu0
      %v694 = vpop.f32.mrb[0].mxu0
      %v695 = vadd.f32 %v279, %v694
      %v696 = vpop.f32.mrb[0].mxu0
      %697 = vmatprep.mubr.bf16.mxu0 %v394
      %698 = vmatmul.mubr.bf16.gmra.mrb[0].mxu0 %v393
      %v699 = vpop.f32.mrb[0].mxu0
      %v700 = vadd.f32 %v279, %v699
      %v701 = vpop.f32.mrb[0].mxu0
      %v702 = vpop.f32.mrb[0].mxu0
      %v703 = vadd.f32 %v279, %v702
      %v704 = vpop.f32.mrb[0].mxu0
      %705 = vmatprep.mubr.bf16.mxu0 %v398
      %706 = vmatmul.mubr.bf16.gmra.mrb[0].mxu0 %v397
      %v707 = vpop.f32.mrb[0].mxu0
      %v708 = vadd.f32 %v279, %v707
      %v709 = vpop.f32.mrb[0].mxu0
      %v710 = vpop.f32.mrb[0].mxu0
      %v711 = vadd.f32 %v279, %v710
      %v712 = vpop.f32.mrb[0].mxu0
      %713 = vmatprep.mubr.bf16.mxu0 %v402
      %714 = vmatmul.mubr.bf16.gmra.mrb[0].mxu0 %v401
      %v715 = vpop.f32.mrb[0].mxu0
      %v716 = vadd.f32 %v279, %v715
      %v717 = vpop.f32.mrb[0].mxu0
      %v718 = vpop.f32.mrb[0].mxu0
      %v719 = vadd.f32 %v279, %v718
      %v720 = vpop.f32.mrb[0].mxu0
      %721 = vmatprep.mubr.bf16.mxu0 %v406
      %722 = vmatmul.mubr.bf16.gmra.mrb[0].mxu0 %v405
      %v723 = vpop.f32.mrb[0].mxu0
      %v724 = vadd.f32 %v279, %v723
      %v725 = vpop.f32.mrb[0].mxu0
      %v726 = vpop.f32.mrb[0].mxu0
      %v727 = vadd.f32 %v279, %v726
      %v728 = vpop.f32.mrb[0].mxu0
      %729 = vdwg.mxu0
      %730 = vmatprep.subr.bf16.mxu0 0
      %731 = vmatpush1.bf16.msra.mxu0 %v585
      %732 = vmatprep.subr.bf16.mxu0 0
      %733 = vmatpush1.bf16.msra.mxu0 %v586
      %734 = vmatprep.subr.bf16.mxu0 0
      %735 = vmatpush1.bf16.msra.mxu0 %v587
      %736 = vmatprep.subr.bf16.mxu0 0
      %737 = vmatpush1.bf16.msra.mxu0 %v588
      %738 = vmatprep.subr.bf16.mxu0 0
      %739 = vmatpush1.bf16.msra.mxu0 %v589
      %740 = vmatprep.subr.bf16.mxu0 0
      %741 = vmatpush1.bf16.msra.mxu0 %v590
      %742 = vmatprep.subr.bf16.mxu0 0
      %743 = vmatpush1.bf16.msra.mxu0 %v591
      %744 = vmatprep.subr.bf16.mxu0 0
      %745 = vmatpush1.bf16.msra.mxu0 %v592
      %746 = vmatprep.subr.bf16.mxu0 0
      %747 = vmatpush1.bf16.msra.mxu0 %v593
      %748 = vmatprep.subr.bf16.mxu0 0
      %749 = vmatpush1.bf16.msra.mxu0 %v594
      %750 = vmatprep.subr.bf16.mxu0 0
      %751 = vmatpush1.bf16.msra.mxu0 %v595
      %752 = vmatprep.subr.bf16.mxu0 0
      %753 = vmatpush1.bf16.msra.mxu0 %v596
      %754 = vmatprep.subr.bf16.mxu0 0
      %755 = vmatpush1.bf16.msra.mxu0 %v597
      %756 = vmatprep.subr.bf16.mxu0 0
      %757 = vmatpush1.bf16.msra.mxu0 %v598
      %758 = vmatprep.subr.bf16.mxu0 0
      %759 = vmatpush1.bf16.msra.mxu0 %v599
      %760 = vmatprep.subr.bf16.mxu0 0
      %761 = vmatpush1.bf16.msra.mxu0 %v600
      %762 = vmatprep.mubr.bf16.mxu0 %v380
      %763 = vmatmul.mubr.bf16.gmra.mrb[0].mxu0 %v379
      %v764 = vpop.f32.mrb[0].mxu0
      %v765 = vadd.f32 %v668, %v764
      %v766 = vpop.f32.mrb[0].mxu0
      %v767 = vpop.f32.mrb[0].mxu0
      %v768 = vadd.f32 %v671, %v767
      %v769 = vpop.f32.mrb[0].mxu0
      %770 = vmatprep.mubr.bf16.mxu0 %v384
      %771 = vmatmul.mubr.bf16.gmra.mrb[0].mxu0 %v383
      %v772 = vpop.f32.mrb[0].mxu0
      %v773 = vadd.f32 %v676, %v772
      %v774 = vpop.f32.mrb[0].mxu0
      %v775 = vpop.f32.mrb[0].mxu0
      %v776 = vadd.f32 %v679, %v775
      %v777 = vpop.f32.mrb[0].mxu0
      %778 = vmatprep.mubr.bf16.mxu0 %v388
      %779 = vmatmul.mubr.bf16.gmra.mrb[0].mxu0 %v387
      %v780 = vpop.f32.mrb[0].mxu0
      %v781 = vadd.f32 %v684, %v780
      %v782 = vpop.f32.mrb[0].mxu0
      %v783 = vpop.f32.mrb[0].mxu0
      %v784 = vadd.f32 %v687, %v783
      %v785 = vpop.f32.mrb[0].mxu0
      %786 = vmatprep.mubr.bf16.mxu0 %v392
      %787 = vmatmul.mubr.bf16.gmra.mrb[0].mxu0 %v391
      %v788 = vpop.f32.mrb[0].mxu0
      %v789 = vadd.f32 %v692, %v788
      %v790 = vpop.f32.mrb[0].mxu0
      %v791 = vpop.f32.mrb[0].mxu0
      %v792 = vadd.f32 %v695, %v791
      %v793 = vpop.f32.mrb[0].mxu0
      %794 = vmatprep.mubr.bf16.mxu0 %v396
      %795 = vmatmul.mubr.bf16.gmra.mrb[0].mxu0 %v395
      %v796 = vpop.f32.mrb[0].mxu0
      %v797 = vadd.f32 %v700, %v796
      %v798 = vpop.f32.mrb[0].mxu0
      %v799 = vpop.f32.mrb[0].mxu0
      %v800 = vadd.f32 %v703, %v799
      %v801 = vpop.f32.mrb[0].mxu0
      %802 = vmatprep.mubr.bf16.mxu0 %v400
      %803 = vmatmul.mubr.bf16.gmra.mrb[0].mxu0 %v399
      %v804 = vpop.f32.mrb[0].mxu0
      %v805 = vadd.f32 %v708, %v804
      %v806 = vpop.f32.mrb[0].mxu0
      %v807 = vpop.f32.mrb[0].mxu0
      %v808 = vadd.f32 %v711, %v807
      %v809 = vpop.f32.mrb[0].mxu0
      %810 = vmatprep.mubr.bf16.mxu0 %v404
      %811 = vmatmul.mubr.bf16.gmra.mrb[0].mxu0 %v403
      %v812 = vpop.f32.mrb[0].mxu0
      %v813 = vadd.f32 %v716, %v812
      %v814 = vpop.f32.mrb[0].mxu0
      %v815 = vpop.f32.mrb[0].mxu0
      %v816 = vadd.f32 %v719, %v815
      %v817 = vpop.f32.mrb[0].mxu0
      %818 = vmatprep.mubr.bf16.mxu0 %v408
      %819 = vmatmul.mubr.bf16.gmra.mrb[0].mxu0 %v407
      %v820 = vpop.f32.mrb[0].mxu0
      %v821 = vadd.f32 %v724, %v820
      %v822 = vpop.f32.mrb[0].mxu0
      %v823 = vpop.f32.mrb[0].mxu0
      %v824 = vadd.f32 %v727, %v823
      %v825 = vpop.f32.mrb[0].mxu0
      %826 = vdwg.mxu0
      %v827 = vmax.f32 %v765, 0.0
      %v828 = vmax.f32 %v768, 0.0
      %v829 = vmax.f32 %v773, 0.0
      %v830 = vmax.f32 %v776, 0.0
      %v831 = vmax.f32 %v781, 0.0
      %v832 = vmax.f32 %v784, 0.0
      %v833 = vmax.f32 %v789, 0.0
      %v834 = vmax.f32 %v792, 0.0
      %v835 = vmax.f32 %v797, 0.0
      %v836 = vmax.f32 %v800, 0.0
      %v837 = vmax.f32 %v805, 0.0
      %v838 = vmax.f32 %v808, 0.0
      %v839 = vmax.f32 %v813, 0.0
      %v840 = vmax.f32 %v816, 0.0
      %v841 = vmax.f32 %v821, 0.0
      %v842 = vmax.f32 %v824, 0.0
      %843 = vst [vmem:[%s175] sm:$0xff] %v827
      %844 = vst [vmem:[%s175 + $0x8] sm:$0xff] %v828
      %845 = vst [vmem:[%s175 + $0x10] sm:$0xff] %v829
      %846 = vst [vmem:[%s175 + $0x18] sm:$0xff] %v830
      %847 = vst [vmem:[%s175 + $0x20] sm:$0xff] %v831
      %848 = vst [vmem:[%s175 + $0x28] sm:$0xff] %v832
      %849 = vst [vmem:[%s175 + $0x30] sm:$0xff] %v833
      %850 = vst [vmem:[%s175 + $0x38] sm:$0xff] %v834
      %851 = vst [vmem:[%s175 + $0x40] sm:$0xff] %v835
      %852 = vst [vmem:[%s175 + $0x48] sm:$0xff] %v836
      %853 = vst [vmem:[%s175 + $0x50] sm:$0xff] %v837
      %854 = vst [vmem:[%s175 + $0x58] sm:$0xff] %v838
      %855 = vst [vmem:[%s175 + $0x60] sm:$0xff] %v839
      %856 = vst [vmem:[%s175 + $0x68] sm:$0xff] %v840
      %857 = vst [vmem:[%s175 + $0x70] sm:$0xff] %v841
      %858 = vst [vmem:[%s175 + $0x78] sm:$0xff] %v842
      %s859 = smul.u32 16, %s14
      %p860 = scmp.lt.s32.totalorder %s859, 63
      %s861 = scalar_select %p860, %s859, 63
      %s862 = smul.addr %s861, 8
      %s863 = scalar_lea.vmem %s3, %s862
      // Predicated region
      $region33: #{half_edge_resnet_forward.7} parent=31 // pred_check
        %p864 = pneg %p100
      $region34: #{half_edge_resnet_forward.7} parent=31 // pred_check_branch
        %866 = sbr.rel (%p864) target = $region36
      $region35: #{half_edge_resnet_forward.7} parent=31 // pred_region
        %s867 = smul.u32 16, %s14
      $region36: #{half_edge_resnet_forward.7} parent=31 // pred_fallthru
        _
    $region32: #{half_edge_resnet_forward.7} parent=5 // pred_fallthru
      _
    %p868 = scmp.le.s32.totalorder 2, %s9
    // Predicated region
    $region37: #{half_edge_resnet_forward.7} parent=5 // pred_check
      %p869 = pneg %p868
    $region38: #{half_edge_resnet_forward.7} parent=5 // pred_check_branch
      %871 = sbr.rel (%p869) target = $region40
    $region39: #{half_edge_resnet_forward.7} parent=5 // pred_region
      %s872 = ssub.s32 %s9, 2
      // Predicated region
      $region41: #{half_edge_resnet_forward.7} parent=39 // pred_check
        %p873 = pneg %p106
      $region42: #{half_edge_resnet_forward.7} parent=39 // pred_check_branch
        %875 = sbr.rel (%p873) target = $region44
      $region43: #{half_edge_resnet_forward.7} parent=39 // pred_region
        %s876 = smul.u32 16, %s15
        %p877 = scmp.lt.s32.totalorder %s876, 63
        %s878 = scalar_select %p877, %s876, 63
        %s879 = smul.addr %s878, 8
        %s880 = scalar_lea.vmem %s3, %s879
      $region44: #{half_edge_resnet_forward.7} parent=39 // pred_fallthru
        _
    $region40: #{half_edge_resnet_forward.7} parent=5 // pred_fallthru
      _
  $region6: #{half_edge_resnet_forward.7} parent=0 // loop_footer
    %s13 = sadd.s32 1, %s9
  $region7: #{half_edge_resnet_forward.7} parent=0 // loop_footer_branch
    %8 = sbr.rel target = $region3
  $region8: #{half_edge_resnet_forward.7} parent=0 // loop_exit
    _

// kernel: half_edge_resnet_forward.8
$region0: #{half_edge_resnet_forward.8}
  #allocation0 [shape = 'u32[]', space=smem, size = 0x4, offset = 0x4, fixed_abs, tag = 'smem constant byte address 0x4 - core index']
  #allocation1 [shape = 'u32[144,128]{1,0:T(1,128)}', space=vmem, size = 0x12000, scoped, tag = 'internal scratch']
  %s0 = inlined_call_operand.vmem [shape: bf16[512,512], index: 0, kind: input, shape index: {}]
  %s1 = inlined_call_operand.vmem [shape: bf16[512,128], index: 1, kind: input, shape index: {}]
  %s2 = inlined_call_operand.vmem [shape: f32[1,128], index: 2, kind: input, shape index: {}]
  %s3 = inlined_call_operand.vmem [shape: f32[512,128], index: 3, kind: input, shape index: {}]
  %s4 = inlined_call_operand.vmem [shape: f32[512,128], index: 4, kind: output, shape index: {}]
  %s5 = sld [smem:[#allocation0]]
  $region49: #{half_edge_resnet_forward.8} parent=0
    _
  %s7 = ssub.s32 1, %s5
  %s8 = scalar_select 0, %s7, %s5
  loop: start=0, step=1, limit=6
  $region2: #{half_edge_resnet_forward.8} parent=0 // loop_pre_header
    _
  $region3: #{half_edge_resnet_forward.8} parent=0 // loop_header
    %s10 = sphi 0, %s14
    %p11 = scmp.ge.s32.totalorder %s10, 6
    %s20 = sphi 0, %s22
    %s23 = sphi 0, %s20
    %s24 = sphi 0, %s23
    %s40 = sphi 0, %s24
    %s44 = sphi 0, %s44
    %s46 = sphi 0, %s44
    %s47 = sphi 0, %s46
    %s61 = sphi 0, %s47
    %s65 = sphi 0, %s65
    %s67 = sphi 0, %s65
    %s68 = sphi 0, %s67
    %s82 = sphi 0, %s68
    %s88 = sphi 0, %s90
    %s91 = sphi 0, %s88
    %s92 = sphi 0, %s91
    %s108 = sphi 0, %s92
    %s114 = sphi 0, %s116
    %s117 = sphi 0, %s114
    %s118 = sphi 0, %s117
    %s134 = sphi 0, %s118
  $region4: #{half_edge_resnet_forward.8} parent=0 // loop_header_branch
    %13 = sbr.rel (%p11) target = $region8
  $region5: #{half_edge_resnet_forward.8} parent=0 // loop_body
    %s15 = ssub.s32 %s10, 1
    %s16 = ssub.s32 %s10, 2
    %s17 = sadd.s32 %s10, 1
    %s18 = ssub.s32 %s10, %s17
    %p19 = scmp.eq.s32.totalorder %s18, 0
    %s21 = sadd.s32 %s20, 1
    %s22 = scalar_select %p19, %s20, %s21
    %p25 = pneg %p19
    %p26 = scmp.eq.s32.totalorder %s10, 3
    %p27 = por %p25, %p26
    %p28 = scmp.ne.s32.totalorder %s20, %s23
    %p29 = scmp.eq.s32.totalorder %s10, 0
    %p30 = por %p28, %p29
    %p31 = scmp.ne.s32.totalorder %s20, %s23
    %p32 = scmp.eq.s32.totalorder %s15, 3
    %p33 = por %p31, %p32
    %p34 = scmp.ne.s32.totalorder %s23, %s24
    %p35 = scmp.eq.s32.totalorder %s15, 0
    %p36 = por %p34, %p35
    %p37 = scmp.ne.s32.totalorder %s23, %s24
    %p38 = scmp.eq.s32.totalorder %s16, 3
    %p39 = por %p37, %p38
    %p41 = scmp.ne.s32.totalorder %s24, %s40
    %p42 = scmp.eq.s32.totalorder %s16, 0
    %p43 = por %p41, %p42
    %s45 = sadd.s32 %s44, 1
    %p48 = scmp.eq.s32.totalorder %s10, 3
    %p49 = scmp.ne.s32.totalorder %s44, %s46
    %p50 = scmp.eq.s32.totalorder %s10, 0
    %p51 = por %p49, %p50
    %p52 = scmp.ne.s32.totalorder %s44, %s46
    %p53 = scmp.eq.s32.totalorder %s15, 3
    %p54 = por %p52, %p53
    %p55 = scmp.ne.s32.totalorder %s46, %s47
    %p56 = scmp.eq.s32.totalorder %s15, 0
    %p57 = por %p55, %p56
    %p58 = scmp.ne.s32.totalorder %s46, %s47
    %p59 = scmp.eq.s32.totalorder %s16, 3
    %p60 = por %p58, %p59
    %p62 = scmp.ne.s32.totalorder %s47, %s61
    %p63 = scmp.eq.s32.totalorder %s16, 0
    %p64 = por %p62, %p63
    %s66 = sadd.s32 %s65, 1
    %p69 = scmp.eq.s32.totalorder %s10, 3
    %p70 = scmp.ne.s32.totalorder %s65, %s67
    %p71 = scmp.eq.s32.totalorder %s10, 0
    %p72 = por %p70, %p71
    %p73 = scmp.ne.s32.totalorder %s65, %s67
    %p74 = scmp.eq.s32.totalorder %s15, 3
    %p75 = por %p73, %p74
    %p76 = scmp.ne.s32.totalorder %s67, %s68
    %p77 = scmp.eq.s32.totalorder %s15, 0
    %p78 = por %p76, %p77
    %p79 = scmp.ne.s32.totalorder %s67, %s68
    %p80 = scmp.eq.s32.totalorder %s16, 3
    %p81 = por %p79, %p80
    %p83 = scmp.ne.s32.totalorder %s68, %s82
    %p84 = scmp.eq.s32.totalorder %s16, 0
    %p85 = por %p83, %p84
    %s86 = ssub.s32 %s10, %s17
    %p87 = scmp.eq.s32.totalorder %s86, 0
    %s89 = sadd.s32 %s88, 1
    %s90 = scalar_select %p87, %s88, %s89
    %p93 = pneg %p87
    %p94 = scmp.eq.s32.totalorder %s10, 3
    %p95 = por %p93, %p94
    %p96 = scmp.ne.s32.totalorder %s88, %s91
    %p97 = scmp.eq.s32.totalorder %s10, 0
    %p98 = por %p96, %p97
    %p99 = scmp.ne.s32.totalorder %s88, %s91
    %p100 = scmp.eq.s32.totalorder %s15, 3
    %p101 = por %p99, %p100
    %p102 = scmp.ne.s32.totalorder %s91, %s92
    %p103 = scmp.eq.s32.totalorder %s15, 0
    %p104 = por %p102, %p103
    %p105 = scmp.ne.s32.totalorder %s91, %s92
    %p106 = scmp.eq.s32.totalorder %s16, 3
    %p107 = por %p105, %p106
    %p109 = scmp.ne.s32.totalorder %s92, %s108
    %p110 = scmp.eq.s32.totalorder %s16, 0
    %p111 = por %p109, %p110
    %s112 = ssub.s32 %s10, %s17
    %p113 = scmp.eq.s32.totalorder %s112, 0
    %s115 = sadd.s32 %s114, 1
    %s116 = scalar_select %p113, %s114, %s115
    %p119 = pneg %p113
    %p120 = scmp.eq.s32.totalorder %s10, 3
    %p121 = por %p119, %p120
    %p122 = scmp.ne.s32.totalorder %s114, %s117
    %p123 = scmp.eq.s32.totalorder %s10, 0
    %p124 = por %p122, %p123
    %p125 = scmp.ne.s32.totalorder %s114, %s117
    %p126 = scmp.eq.s32.totalorder %s15, 3
    %p127 = por %p125, %p126
    %p128 = scmp.ne.s32.totalorder %s117, %s118
    %p129 = scmp.eq.s32.totalorder %s15, 0
    %p130 = por %p128, %p129
    %p131 = scmp.ne.s32.totalorder %s117, %s118
    %p132 = scmp.eq.s32.totalorder %s16, 3
    %p133 = por %p131, %p132
    %p135 = scmp.ne.s32.totalorder %s118, %s134
    %p136 = scmp.eq.s32.totalorder %s16, 0
    %p137 = por %p135, %p136
    %p138 = scmp.le.s32.totalorder 1, %s10
    %p139 = scmp.lt.s32.totalorder %s10, 5
    %p140 = pnand %p138, %p139
    %p141 = pneg %p140
    // Predicated region
    $region9: #{half_edge_resnet_forward.8} parent=5 // pred_check
      _
    $region10: #{half_edge_resnet_forward.8} parent=5 // pred_check_branch
      %143 = sbr.rel (%p140) target = $region12
    $region11: #{half_edge_resnet_forward.8} parent=5 // pred_region
      %s144 = ssub.s32 %s10, 1
      // Predicated region
      $region13: #{half_edge_resnet_forward.8} parent=11 // pred_check
        %p145 = pneg %p57
      $region14: #{half_edge_resnet_forward.8} parent=11 // pred_check_branch
        %147 = sbr.rel (%p145) target = $region16
      $region15: #{half_edge_resnet_forward.8} parent=11 // pred_region
        _
      $region16: #{half_edge_resnet_forward.8} parent=11 // pred_fallthru
        _
      // Predicated region
      $region17: #{half_edge_resnet_forward.8} parent=11 // pred_check
        %p148 = pneg %p78
      $region18: #{half_edge_resnet_forward.8} parent=11 // pred_check_branch
        %150 = sbr.rel (%p148) target = $region20
      $region19: #{half_edge_resnet_forward.8} parent=11 // pred_region
        _
      $region20: #{half_edge_resnet_forward.8} parent=11 // pred_fallthru
        _
    $region12: #{half_edge_resnet_forward.8} parent=5 // pred_fallthru
      _
    %p151 = scmp.lt.s32.totalorder %s10, 4
    // Predicated region
    $region21: #{half_edge_resnet_forward.8} parent=5 // pred_check
      %p152 = pneg %p151
    $region22: #{half_edge_resnet_forward.8} parent=5 // pred_check_branch
      %154 = sbr.rel (%p152) target = $region24
    $region23: #{half_edge_resnet_forward.8} parent=5 // pred_region
      // Predicated region
      $region25: #{half_edge_resnet_forward.8} parent=23 // pred_check
        %p155 = pneg %p30
      $region26: #{half_edge_resnet_forward.8} parent=23 // pred_check_branch
        %157 = sbr.rel (%p155) target = $region28
      $region27: #{half_edge_resnet_forward.8} parent=23 // pred_region
        %s158 = smul.u32 16, %s10
        %p159 = scmp.lt.s32.totalorder %s158, 63
        %s160 = scalar_select %p159, %s158, 63
        %s161 = smul.addr %s160, 4
        %s162 = smul.addr %s161, 4
        %s163 = scalar_lea.vmem %s0, %s162
        %s164 = smul.u32 16, %s10
      $region28: #{half_edge_resnet_forward.8} parent=23 // pred_fallthru
        _
      // Predicated region
      $region29: #{half_edge_resnet_forward.8} parent=23 // pred_check
        %p165 = pneg %p98
      $region30: #{half_edge_resnet_forward.8} parent=23 // pred_check_branch
        %167 = sbr.rel (%p165) target = $region32
      $region31: #{half_edge_resnet_forward.8} parent=23 // pred_region
        %s168 = smul.u32 16, %s10
        %p169 = scmp.lt.s32.totalorder %s168, 63
        %s170 = scalar_select %p169, %s168, 63
        %s171 = smul.addr %s170, 8
        %s172 = scalar_lea.vmem %s3, %s171
        %s173 = smul.u32 16, %s10
      $region32: #{half_edge_resnet_forward.8} parent=23 // pred_fallthru
        _
    $region24: #{half_edge_resnet_forward.8} parent=5 // pred_fallthru
      _
    %p174 = scmp.le.s32.totalorder 1, %s10
    %p175 = scmp.lt.s32.totalorder %s10, 5
    %p176 = pnand %p174, %p175
    %p177 = pneg %p176
    // Predicated region
    $region33: #{half_edge_resnet_forward.8} parent=5 // pred_check
      _
    $region34: #{half_edge_resnet_forward.8} parent=5 // pred_check_branch
      %179 = sbr.rel (%p176) target = $region36
    $region35: #{half_edge_resnet_forward.8} parent=5 // pred_region
      %s180 = ssub.s32 %s10, 1
      %s181 = smul.u32 16, %s15
      %p182 = scmp.lt.s32.totalorder %s181, 63
      %s183 = scalar_select %p182, %s181, 63
      %s184 = smul.addr %s183, 4
      %s185 = smul.addr %s184, 4
      %s186 = scalar_lea.vmem %s0, %s185
      %p187 = pneg %p36
      %p188 = pneg %p33
      %p189 = pneg %p57
      %p190 = pneg %p54
      %p191 = pneg %p78
      %p192 = pneg %p75
      %s193 = smul.u32 16, %s15
      %p194 = scmp.lt.s32.totalorder %s193, 63
      %s195 = scalar_select %p194, %s193, 63
      %s196 = smul.addr %s195, 8
      %s197 = scalar_lea.vmem %s3, %s196
      %p198 = pneg %p104
      %p199 = pneg %p101
      %p200 = pneg %p130
      %p201 = pneg %p127
      %s202 = smul.u32 16, %s15
      %p203 = scmp.lt.s32.totalorder %s202, 63
      %s204 = scalar_select %p203, %s202, 63
      %s205 = smul.addr %s204, 8
      %s206 = scalar_lea.vmem %s4, %s205
      %s207 = smul.u32 16, %s15
      %p208 = scmp.lt.s32.totalorder %s207, 63
      %s209 = scalar_select %p208, %s207, 63
      %s210 = smul.addr %s209, 4
      %s211 = smul.addr %s210, 4
      %s212 = scalar_lea.vmem %s0, %s211
      %s213 = smul.u32 16, %s15
      %s214 = smul.u32 16, %s15
      %p215 = scmp.lt.s32.totalorder %s214, 63
      %s216 = scalar_select %p215, %s214, 63
      %s217 = smul.addr %s216, 8
      %s218 = scalar_lea.vmem %s3, %s217
      %s219 = smul.u32 16, %s15
      %s220 = smul.u32 16, %s15
      %p221 = scmp.lt.s32.totalorder %s220, 63
      %s222 = scalar_select %p221, %s220, 63
      %s223 = smul.addr %s222, 8
      %s224 = scalar_lea.vmem %s4, %s223
      %s225 = smul.u32 16, %s15
      %v227 = vld [vmem:[%s212] sm:$0xff]
      %v228 = vld [vmem:[%s212 + $0x8] sm:$0xff]
      %v229 = vld [vmem:[%s212 + $0x10] sm:$0xff]
      %v230 = vld [vmem:[%s212 + $0x18] sm:$0xff]
      %v231 = vld [vmem:[%s212 + $0x20] sm:$0xff]
      %v232 = vld [vmem:[%s212 + $0x28] sm:$0xff]
      %v233 = vld [vmem:[%s212 + $0x30] sm:$0xff]
      %v234 = vld [vmem:[%s212 + $0x38] sm:$0xff]
      %v235 = vld [vmem:[%s212 + $0x40] sm:$0xff]
      %v236 = vld [vmem:[%s212 + $0x48] sm:$0xff]
      %v237 = vld [vmem:[%s212 + $0x50] sm:$0xff]
      %v238 = vld [vmem:[%s212 + $0x58] sm:$0xff]
      %v239 = vld [vmem:[%s212 + $0x60] sm:$0xff]
      %v240 = vld [vmem:[%s212 + $0x68] sm:$0xff]
      %v241 = vld [vmem:[%s212 + $0x70] sm:$0xff]
      %v242 = vld [vmem:[%s212 + $0x78] sm:$0xff]
      %v243 = vld [vmem:[%s212 + $0x80] sm:$0xff]
      %v244 = vld [vmem:[%s212 + $0x88] sm:$0xff]
      %v245 = vld [vmem:[%s212 + $0x90] sm:$0xff]
      %v246 = vld [vmem:[%s212 + $0x98] sm:$0xff]
      %v247 = vld [vmem:[%s212 + $0xa0] sm:$0xff]
      %v248 = vld [vmem:[%s212 + $0xa8] sm:$0xff]
      %v249 = vld [vmem:[%s212 + $0xb0] sm:$0xff]
      %v250 = vld [vmem:[%s212 + $0xb8] sm:$0xff]
      %v251 = vld [vmem:[%s212 + $0xc0] sm:$0xff]
      %v252 = vld [vmem:[%s212 + $0xc8] sm:$0xff]
      %v253 = vld [vmem:[%s212 + $0xd0] sm:$0xff]
      %v254 = vld [vmem:[%s212 + $0xd8] sm:$0xff]
      %v255 = vld [vmem:[%s212 + $0xe0] sm:$0xff]
      %v256 = vld [vmem:[%s212 + $0xe8] sm:$0xff]
      %v257 = vld [vmem:[%s212 + $0xf0] sm:$0xff]
      %v258 = vld [vmem:[%s212 + $0xf8] sm:$0xff]
      %v259 = vld [vmem:[%s1] sm:$0xf]
      %v260 = vld [vmem:[%s1 + $0x4] sm:$0xf]
      %v261 = vld [vmem:[%s1 + $0x8] sm:$0xf]
      %v262 = vld [vmem:[%s1 + $0xc] sm:$0xf]
      %v263 = vld [vmem:[%s1 + $0x10] sm:$0xf]
      %v264 = vld [vmem:[%s1 + $0x14] sm:$0xf]
      %v265 = vld [vmem:[%s1 + $0x18] sm:$0xf]
      %v266 = vld [vmem:[%s1 + $0x1c] sm:$0xf]
      %v267 = vld [vmem:[%s1 + $0x20] sm:$0xf]
      %v268 = vld [vmem:[%s1 + $0x24] sm:$0xf]
      %v269 = vld [vmem:[%s1 + $0x28] sm:$0xf]
      %v270 = vld [vmem:[%s1 + $0x2c] sm:$0xf]
      %v271 = vld [vmem:[%s1 + $0x30] sm:$0xf]
      %v272 = vld [vmem:[%s1 + $0x34] sm:$0xf]
      %v273 = vld [vmem:[%s1 + $0x38] sm:$0xf]
      %v274 = vld [vmem:[%s1 + $0x3c] sm:$0xf]
      %v275 = vld [vmem:[%s1 + $0x40] sm:$0xf]
      %v276 = vld [vmem:[%s1 + $0x44] sm:$0xf]
      %v277 = vld [vmem:[%s1 + $0x48] sm:$0xf]
      %v278 = vld [vmem:[%s1 + $0x4c] sm:$0xf]
      %v279 = vld [vmem:[%s1 + $0x50] sm:$0xf]
      %v280 = vld [vmem:[%s1 + $0x54] sm:$0xf]
      %v281 = vld [vmem:[%s1 + $0x58] sm:$0xf]
      %v282 = vld [vmem:[%s1 + $0x5c] sm:$0xf]
      %v283 = vld [vmem:[%s1 + $0x60] sm:$0xf]
      %v284 = vld [vmem:[%s1 + $0x64] sm:$0xf]
      %v285 = vld [vmem:[%s1 + $0x68] sm:$0xf]
      %v286 = vld [vmem:[%s1 + $0x6c] sm:$0xf]
      %v287 = vld [vmem:[%s1 + $0x70] sm:$0xf]
      %v288 = vld [vmem:[%s1 + $0x74] sm:$0xf]
      %v289 = vld [vmem:[%s1 + $0x78] sm:$0xf]
      %v290 = vld [vmem:[%s1 + $0x7c] sm:$0xf]
      %v291 = vld [vmem:[%s1 + $0x80] sm:$0xf]
      %v292 = vld [vmem:[%s1 + $0x84] sm:$0xf]
      %v293 = vld [vmem:[%s1 + $0x88] sm:$0xf]
      %v294 = vld [vmem:[%s1 + $0x8c] sm:$0xf]
      %v295 = vld [vmem:[%s1 + $0x90] sm:$0xf]
      %v296 = vld [vmem:[%s1 + $0x94] sm:$0xf]
      %v297 = vld [vmem:[%s1 + $0x98] sm:$0xf]
      %v298 = vld [vmem:[%s1 + $0x9c] sm:$0xf]
      %v299 = vld [vmem:[%s1 + $0xa0] sm:$0xf]
      %v300 = vld [vmem:[%s1 + $0xa4] sm:$0xf]
      %v301 = vld [vmem:[%s1 + $0xa8] sm:$0xf]
      %v302 = vld [vmem:[%s1 + $0xac] sm:$0xf]
      %v303 = vld [vmem:[%s1 + $0xb0] sm:$0xf]
      %v304 = vld [vmem:[%s1 + $0xb4] sm:$0xf]
      %v305 = vld [vmem:[%s1 + $0xb8] sm:$0xf]
      %v306 = vld [vmem:[%s1 + $0xbc] sm:$0xf]
      %v307 = vld [vmem:[%s1 + $0xc0] sm:$0xf]
      %v308 = vld [vmem:[%s1 + $0xc4] sm:$0xf]
      %v309 = vld [vmem:[%s1 + $0xc8] sm:$0xf]
      %v310 = vld [vmem:[%s1 + $0xcc] sm:$0xf]
      %v311 = vld [vmem:[%s1 + $0xd0] sm:$0xf]
      %v312 = vld [vmem:[%s1 + $0xd4] sm:$0xf]
      %v313 = vld [vmem:[%s1 + $0xd8] sm:$0xf]
      %v314 = vld [vmem:[%s1 + $0xdc] sm:$0xf]
      %v315 = vld [vmem:[%s1 + $0xe0] sm:$0xf]
      %v316 = vld [vmem:[%s1 + $0xe4] sm:$0xf]
      %v317 = vld [vmem:[%s1 + $0xe8] sm:$0xf]
      %v318 = vld [vmem:[%s1 + $0xec] sm:$0xf]
      %v319 = vld [vmem:[%s1 + $0xf0] sm:$0xf]
      %v320 = vld [vmem:[%s1 + $0xf4] sm:$0xf]
      %v321 = vld [vmem:[%s1 + $0xf8] sm:$0xf]
      %v322 = vld [vmem:[%s1 + $0xfc] sm:$0xf]
      %v323 = vld [vmem:[%s2] sm:$0x1]
      %v325 = vlaneseq
      %v326 = vshrl.u32 %v325, 7
      %v327 = vsub.s32 0, %v326
      %v328 = vrot.slane %v323, %v327
      %v362 = vunpack.c.l.b16 %v227
      %v363 = vunpack.c.h.b16 %v227
      %v364 = vunpack.c.l.b16 %v228
      %v365 = vunpack.c.h.b16 %v228
      %v366 = vunpack.c.l.b16 %v229
      %v367 = vunpack.c.h.b16 %v229
      %v368 = vunpack.c.l.b16 %v230
      %v369 = vunpack.c.h.b16 %v230
      %v370 = vunpack.c.l.b16 %v231
      %v371 = vunpack.c.h.b16 %v231
      %v372 = vunpack.c.l.b16 %v232
      %v373 = vunpack.c.h.b16 %v232
      %v374 = vunpack.c.l.b16 %v233
      %v375 = vunpack.c.h.b16 %v233
      %v376 = vunpack.c.l.b16 %v234
      %v377 = vunpack.c.h.b16 %v234
      %v378 = vunpack.c.l.b16 %v235
      %v379 = vunpack.c.h.b16 %v235
      %v380 = vunpack.c.l.b16 %v236
      %v381 = vunpack.c.h.b16 %v236
      %v382 = vunpack.c.l.b16 %v237
      %v383 = vunpack.c.h.b16 %v237
      %v384 = vunpack.c.l.b16 %v238
      %v385 = vunpack.c.h.b16 %v238
      %v386 = vunpack.c.l.b16 %v239
      %v387 = vunpack.c.h.b16 %v239
      %v388 = vunpack.c.l.b16 %v240
      %v389 = vunpack.c.h.b16 %v240
      %v390 = vunpack.c.l.b16 %v241
      %v391 = vunpack.c.h.b16 %v241
      %v392 = vunpack.c.l.b16 %v242
      %v393 = vunpack.c.h.b16 %v242
      %v394 = vunpack.c.l.b16 %v243
      %v395 = vunpack.c.h.b16 %v243
      %v396 = vunpack.c.l.b16 %v244
      %v397 = vunpack.c.h.b16 %v244
      %v398 = vunpack.c.l.b16 %v245
      %v399 = vunpack.c.h.b16 %v245
      %v400 = vunpack.c.l.b16 %v246
      %v401 = vunpack.c.h.b16 %v246
      %v402 = vunpack.c.l.b16 %v247
      %v403 = vunpack.c.h.b16 %v247
      %v404 = vunpack.c.l.b16 %v248
      %v405 = vunpack.c.h.b16 %v248
      %v406 = vunpack.c.l.b16 %v249
      %v407 = vunpack.c.h.b16 %v249
      %v408 = vunpack.c.l.b16 %v250
      %v409 = vunpack.c.h.b16 %v250
      %v410 = vunpack.c.l.b16 %v251
      %v411 = vunpack.c.h.b16 %v251
      %v412 = vunpack.c.l.b16 %v252
      %v413 = vunpack.c.h.b16 %v252
      %v414 = vunpack.c.l.b16 %v253
      %v415 = vunpack.c.h.b16 %v253
      %v416 = vunpack.c.l.b16 %v254
      %v417 = vunpack.c.h.b16 %v254
      %v418 = vunpack.c.l.b16 %v255
      %v419 = vunpack.c.h.b16 %v255
      %v420 = vunpack.c.l.b16 %v256
      %v421 = vunpack.c.h.b16 %v256
      %v422 = vunpack.c.l.b16 %v257
      %v423 = vunpack.c.h.b16 %v257
      %v424 = vunpack.c.l.b16 %v258
      %v425 = vunpack.c.h.b16 %v258
      %v426 = vpack.c.b16 %v366, %v362
      %v427 = vpack.c.b16 %v367, %v363
      %v428 = vpack.c.b16 %v368, %v364
      %v429 = vpack.c.b16 %v369, %v365
      %v430 = vpack.c.b16 %v374, %v370
      %v431 = vpack.c.b16 %v375, %v371
      %v432 = vpack.c.b16 %v376, %v372
      %v433 = vpack.c.b16 %v377, %v373
      %v434 = vpack.c.b16 %v382, %v378
      %v435 = vpack.c.b16 %v383, %v379
      %v436 = vpack.c.b16 %v384, %v380
      %v437 = vpack.c.b16 %v385, %v381
      %v438 = vpack.c.b16 %v390, %v386
      %v439 = vpack.c.b16 %v391, %v387
      %v440 = vpack.c.b16 %v392, %v388
      %v441 = vpack.c.b16 %v393, %v389
      %v442 = vpack.c.b16 %v398, %v394
      %v443 = vpack.c.b16 %v399, %v395
      %v444 = vpack.c.b16 %v400, %v396
      %v445 = vpack.c.b16 %v401, %v397
      %v446 = vpack.c.b16 %v406, %v402
      %v447 = vpack.c.b16 %v407, %v403
      %v448 = vpack.c.b16 %v408, %v404
      %v449 = vpack.c.b16 %v409, %v405
      %v450 = vpack.c.b16 %v414, %v410
      %v451 = vpack.c.b16 %v415, %v411
      %v452 = vpack.c.b16 %v416, %v412
      %v453 = vpack.c.b16 %v417, %v413
      %v454 = vpack.c.b16 %v422, %v418
      %v455 = vpack.c.b16 %v423, %v419
      %v456 = vpack.c.b16 %v424, %v420
      %v457 = vpack.c.b16 %v425, %v421
      %v554 = vunpack.c.l.b16 %v259
      %v555 = vunpack.c.l.b16 %v260
      %v556 = vunpack.c.l.b16 %v261
      %v557 = vunpack.c.l.b16 %v262
      %v558 = vunpack.c.l.b16 %v263
      %v559 = vunpack.c.l.b16 %v264
      %v560 = vunpack.c.l.b16 %v265
      %v561 = vunpack.c.l.b16 %v266
      %v562 = vunpack.c.l.b16 %v267
      %v563 = vunpack.c.l.b16 %v268
      %v564 = vunpack.c.l.b16 %v269
      %v565 = vunpack.c.l.b16 %v270
      %v566 = vunpack.c.l.b16 %v271
      %v567 = vunpack.c.l.b16 %v272
      %v568 = vunpack.c.l.b16 %v273
      %v569 = vunpack.c.l.b16 %v274
      %v570 = vunpack.c.l.b16 %v275
      %v571 = vunpack.c.l.b16 %v276
      %v572 = vunpack.c.l.b16 %v277
      %v573 = vunpack.c.l.b16 %v278
      %v574 = vunpack.c.l.b16 %v279
      %v575 = vunpack.c.l.b16 %v280
      %v576 = vunpack.c.l.b16 %v281
      %v577 = vunpack.c.l.b16 %v282
      %v578 = vunpack.c.l.b16 %v283
      %v579 = vunpack.c.l.b16 %v284
      %v580 = vunpack.c.l.b16 %v285
      %v581 = vunpack.c.l.b16 %v286
      %v582 = vunpack.c.l.b16 %v287
      %v583 = vunpack.c.l.b16 %v288
      %v584 = vunpack.c.l.b16 %v289
      %v585 = vunpack.c.l.b16 %v290
      %v586 = vunpack.c.l.b16 %v291
      %v587 = vunpack.c.l.b16 %v292
      %v588 = vunpack.c.l.b16 %v293
      %v589 = vunpack.c.l.b16 %v294
      %v590 = vunpack.c.l.b16 %v295
      %v591 = vunpack.c.l.b16 %v296
      %v592 = vunpack.c.l.b16 %v297
      %v593 = vunpack.c.l.b16 %v298
      %v594 = vunpack.c.l.b16 %v299
      %v595 = vunpack.c.l.b16 %v300
      %v596 = vunpack.c.l.b16 %v301
      %v597 = vunpack.c.l.b16 %v302
      %v598 = vunpack.c.l.b16 %v303
      %v599 = vunpack.c.l.b16 %v304
      %v600 = vunpack.c.l.b16 %v305
      %v601 = vunpack.c.l.b16 %v306
      %v602 = vunpack.c.l.b16 %v307
      %v603 = vunpack.c.l.b16 %v308
      %v604 = vunpack.c.l.b16 %v309
      %v605 = vunpack.c.l.b16 %v310
      %v606 = vunpack.c.l.b16 %v311
      %v607 = vunpack.c.l.b16 %v312
      %v608 = vunpack.c.l.b16 %v313
      %v609 = vunpack.c.l.b16 %v314
      %v610 = vunpack.c.l.b16 %v315
      %v611 = vunpack.c.l.b16 %v316
      %v612 = vunpack.c.l.b16 %v317
      %v613 = vunpack.c.l.b16 %v318
      %v614 = vunpack.c.l.b16 %v319
      %v615 = vunpack.c.l.b16 %v320
      %v616 = vunpack.c.l.b16 %v321
      %v617 = vunpack.c.l.b16 %v322
      %v618 = vpack.c.b16 %v555, %v554
      %v619 = vpack.c.b16 %v557, %v556
      %v620 = vpack.c.b16 %v559, %v558
      %v621 = vpack.c.b16 %v561, %v560
      %v622 = vpack.c.b16 %v563, %v562
      %v623 = vpack.c.b16 %v565, %v564
      %v624 = vpack.c.b16 %v567, %v566
      %v625 = vpack.c.b16 %v569, %v568
      %v626 = vpack.c.b16 %v571, %v570
      %v627 = vpack.c.b16 %v573, %v572
      %v628 = vpack.c.b16 %v575, %v574
      %v629 = vpack.c.b16 %v577, %v576
      %v630 = vpack.c.b16 %v579, %v578
      %v631 = vpack.c.b16 %v581, %v580
      %v632 = vpack.c.b16 %v583, %v582
      %v633 = vpack.c.b16 %v585, %v584
      %v634 = vpack.c.b16 %v587, %v586
      %v635 = vpack.c.b16 %v589, %v588
      %v636 = vpack.c.b16 %v591, %v590
      %v637 = vpack.c.b16 %v593, %v592
      %v638 = vpack.c.b16 %v595, %v594
      %v639 = vpack.c.b16 %v597, %v596
      %v640 = vpack.c.b16 %v599, %v598
      %v641 = vpack.c.b16 %v601, %v600
      %v642 = vpack.c.b16 %v603, %v602
      %v643 = vpack.c.b16 %v605, %v604
      %v644 = vpack.c.b16 %v607, %v606
      %v645 = vpack.c.b16 %v609, %v608
      %v646 = vpack.c.b16 %v611, %v610
      %v647 = vpack.c.b16 %v613, %v612
      %v648 = vpack.c.b16 %v615, %v614
      %v649 = vpack.c.b16 %v617, %v616
      %682 = vmatprep.subr.bf16.mxu0 0
      %683 = vmatpush1.bf16.msra.mxu0 %v618
      %684 = vmatprep.subr.bf16.mxu0 0
      %685 = vmatpush1.bf16.msra.mxu0 %v619
      %686 = vmatprep.subr.bf16.mxu0 0
      %687 = vmatpush1.bf16.msra.mxu0 %v620
      %688 = vmatprep.subr.bf16.mxu0 0
      %689 = vmatpush1.bf16.msra.mxu0 %v621
      %690 = vmatprep.subr.bf16.mxu0 0
      %691 = vmatpush1.bf16.msra.mxu0 %v622
      %692 = vmatprep.subr.bf16.mxu0 0
      %693 = vmatpush1.bf16.msra.mxu0 %v623
      %694 = vmatprep.subr.bf16.mxu0 0
      %695 = vmatpush1.bf16.msra.mxu0 %v624
      %696 = vmatprep.subr.bf16.mxu0 0
      %697 = vmatpush1.bf16.msra.mxu0 %v625
      %698 = vmatprep.subr.bf16.mxu0 0
      %699 = vmatpush1.bf16.msra.mxu0 %v626
      %700 = vmatprep.subr.bf16.mxu0 0
      %701 = vmatpush1.bf16.msra.mxu0 %v627
      %702 = vmatprep.subr.bf16.mxu0 0
      %703 = vmatpush1.bf16.msra.mxu0 %v628
      %704 = vmatprep.subr.bf16.mxu0 0
      %705 = vmatpush1.bf16.msra.mxu0 %v629
      %706 = vmatprep.subr.bf16.mxu0 0
      %707 = vmatpush1.bf16.msra.mxu0 %v630
      %708 = vmatprep.subr.bf16.mxu0 0
      %709 = vmatpush1.bf16.msra.mxu0 %v631
      %710 = vmatprep.subr.bf16.mxu0 0
      %711 = vmatpush1.bf16.msra.mxu0 %v632
      %712 = vmatprep.subr.bf16.mxu0 0
      %713 = vmatpush1.bf16.msra.mxu0 %v633
      %714 = vmatprep.mubr.bf16.mxu0 %v427
      %715 = vmatmul.mubr.bf16.gmra.mrb[0].mxu0 %v426
      %v716 = vpop.f32.mrb[0].mxu0
      %v717 = vadd.f32 %v328, %v716
      %v718 = vpop.f32.mrb[0].mxu0
      %v719 = vpop.f32.mrb[0].mxu0
      %v720 = vadd.f32 %v328, %v719
      %v721 = vpop.f32.mrb[0].mxu0
      %722 = vmatprep.mubr.bf16.mxu0 %v431
      %723 = vmatmul.mubr.bf16.gmra.mrb[0].mxu0 %v430
      %v724 = vpop.f32.mrb[0].mxu0
      %v725 = vadd.f32 %v328, %v724
      %v726 = vpop.f32.mrb[0].mxu0
      %v727 = vpop.f32.mrb[0].mxu0
      %v728 = vadd.f32 %v328, %v727
      %v729 = vpop.f32.mrb[0].mxu0
      %730 = vmatprep.mubr.bf16.mxu0 %v435
      %731 = vmatmul.mubr.bf16.gmra.mrb[0].mxu0 %v434
      %v732 = vpop.f32.mrb[0].mxu0
      %v733 = vadd.f32 %v328, %v732
      %v734 = vpop.f32.mrb[0].mxu0
      %v735 = vpop.f32.mrb[0].mxu0
      %v736 = vadd.f32 %v328, %v735
      %v737 = vpop.f32.mrb[0].mxu0
      %738 = vmatprep.mubr.bf16.mxu0 %v439
      %739 = vmatmul.mubr.bf16.gmra.mrb[0].mxu0 %v438
      %v740 = vpop.f32.mrb[0].mxu0
      %v741 = vadd.f32 %v328, %v740
      %v742 = vpop.f32.mrb[0].mxu0
      %v743 = vpop.f32.mrb[0].mxu0
      %v744 = vadd.f32 %v328, %v743
      %v745 = vpop.f32.mrb[0].mxu0
      %746 = vmatprep.mubr.bf16.mxu0 %v443
      %747 = vmatmul.mubr.bf16.gmra.mrb[0].mxu0 %v442
      %v748 = vpop.f32.mrb[0].mxu0
      %v749 = vadd.f32 %v328, %v748
      %v750 = vpop.f32.mrb[0].mxu0
      %v751 = vpop.f32.mrb[0].mxu0
      %v752 = vadd.f32 %v328, %v751
      %v753 = vpop.f32.mrb[0].mxu0
      %754 = vmatprep.mubr.bf16.mxu0 %v447
      %755 = vmatmul.mubr.bf16.gmra.mrb[0].mxu0 %v446
      %v756 = vpop.f32.mrb[0].mxu0
      %v757 = vadd.f32 %v328, %v756
      %v758 = vpop.f32.mrb[0].mxu0
      %v759 = vpop.f32.mrb[0].mxu0
      %v760 = vadd.f32 %v328, %v759
      %v761 = vpop.f32.mrb[0].mxu0
      %762 = vmatprep.mubr.bf16.mxu0 %v451
      %763 = vmatmul.mubr.bf16.gmra.mrb[0].mxu0 %v450
      %v764 = vpop.f32.mrb[0].mxu0
      %v765 = vadd.f32 %v328, %v764
      %v766 = vpop.f32.mrb[0].mxu0
      %v767 = vpop.f32.mrb[0].mxu0
      %v768 = vadd.f32 %v328, %v767
      %v769 = vpop.f32.mrb[0].mxu0
      %770 = vmatprep.mubr.bf16.mxu0 %v455
      %771 = vmatmul.mubr.bf16.gmra.mrb[0].mxu0 %v454
      %v772 = vpop.f32.mrb[0].mxu0
      %v773 = vadd.f32 %v328, %v772
      %v774 = vpop.f32.mrb[0].mxu0
      %v775 = vpop.f32.mrb[0].mxu0
      %v776 = vadd.f32 %v328, %v775
      %v777 = vpop.f32.mrb[0].mxu0
      %778 = vdwg.mxu0
      %779 = vmatprep.subr.bf16.mxu0 0
      %780 = vmatpush1.bf16.msra.mxu0 %v634
      %781 = vmatprep.subr.bf16.mxu0 0
      %782 = vmatpush1.bf16.msra.mxu0 %v635
      %783 = vmatprep.subr.bf16.mxu0 0
      %784 = vmatpush1.bf16.msra.mxu0 %v636
      %785 = vmatprep.subr.bf16.mxu0 0
      %786 = vmatpush1.bf16.msra.mxu0 %v637
      %787 = vmatprep.subr.bf16.mxu0 0
      %788 = vmatpush1.bf16.msra.mxu0 %v638
      %789 = vmatprep.subr.bf16.mxu0 0
      %790 = vmatpush1.bf16.msra.mxu0 %v639
      %791 = vmatprep.subr.bf16.mxu0 0
      %792 = vmatpush1.bf16.msra.mxu0 %v640
      %793 = vmatprep.subr.bf16.mxu0 0
      %794 = vmatpush1.bf16.msra.mxu0 %v641
      %795 = vmatprep.subr.bf16.mxu0 0
      %796 = vmatpush1.bf16.msra.mxu0 %v642
      %797 = vmatprep.subr.bf16.mxu0 0
      %798 = vmatpush1.bf16.msra.mxu0 %v643
      %799 = vmatprep.subr.bf16.mxu0 0
      %800 = vmatpush1.bf16.msra.mxu0 %v644
      %801 = vmatprep.subr.bf16.mxu0 0
      %802 = vmatpush1.bf16.msra.mxu0 %v645
      %803 = vmatprep.subr.bf16.mxu0 0
      %804 = vmatpush1.bf16.msra.mxu0 %v646
      %805 = vmatprep.subr.bf16.mxu0 0
      %806 = vmatpush1.bf16.msra.mxu0 %v647
      %807 = vmatprep.subr.bf16.mxu0 0
      %808 = vmatpush1.bf16.msra.mxu0 %v648
      %809 = vmatprep.subr.bf16.mxu0 0
      %810 = vmatpush1.bf16.msra.mxu0 %v649
      %811 = vmatprep.mubr.bf16.mxu0 %v429
      %812 = vmatmul.mubr.bf16.gmra.mrb[0].mxu0 %v428
      %v813 = vpop.f32.mrb[0].mxu0
      %v814 = vadd.f32 %v717, %v813
      %v815 = vpop.f32.mrb[0].mxu0
      %v816 = vpop.f32.mrb[0].mxu0
      %v817 = vadd.f32 %v720, %v816
      %v818 = vpop.f32.mrb[0].mxu0
      %819 = vmatprep.mubr.bf16.mxu0 %v433
      %820 = vmatmul.mubr.bf16.gmra.mrb[0].mxu0 %v432
      %v821 = vpop.f32.mrb[0].mxu0
      %v822 = vadd.f32 %v725, %v821
      %v823 = vpop.f32.mrb[0].mxu0
      %v824 = vpop.f32.mrb[0].mxu0
      %v825 = vadd.f32 %v728, %v824
      %v826 = vpop.f32.mrb[0].mxu0
      %827 = vmatprep.mubr.bf16.mxu0 %v437
      %828 = vmatmul.mubr.bf16.gmra.mrb[0].mxu0 %v436
      %v829 = vpop.f32.mrb[0].mxu0
      %v830 = vadd.f32 %v733, %v829
      %v831 = vpop.f32.mrb[0].mxu0
      %v832 = vpop.f32.mrb[0].mxu0
      %v833 = vadd.f32 %v736, %v832
      %v834 = vpop.f32.mrb[0].mxu0
      %835 = vmatprep.mubr.bf16.mxu0 %v441
      %836 = vmatmul.mubr.bf16.gmra.mrb[0].mxu0 %v440
      %v837 = vpop.f32.mrb[0].mxu0
      %v838 = vadd.f32 %v741, %v837
      %v839 = vpop.f32.mrb[0].mxu0
      %v840 = vpop.f32.mrb[0].mxu0
      %v841 = vadd.f32 %v744, %v840
      %v842 = vpop.f32.mrb[0].mxu0
      %843 = vmatprep.mubr.bf16.mxu0 %v445
      %844 = vmatmul.mubr.bf16.gmra.mrb[0].mxu0 %v444
      %v845 = vpop.f32.mrb[0].mxu0
      %v846 = vadd.f32 %v749, %v845
      %v847 = vpop.f32.mrb[0].mxu0
      %v848 = vpop.f32.mrb[0].mxu0
      %v849 = vadd.f32 %v752, %v848
      %v850 = vpop.f32.mrb[0].mxu0
      %851 = vmatprep.mubr.bf16.mxu0 %v449
      %852 = vmatmul.mubr.bf16.gmra.mrb[0].mxu0 %v448
      %v853 = vpop.f32.mrb[0].mxu0
      %v854 = vadd.f32 %v757, %v853
      %v855 = vpop.f32.mrb[0].mxu0
      %v856 = vpop.f32.mrb[0].mxu0
      %v857 = vadd.f32 %v760, %v856
      %v858 = vpop.f32.mrb[0].mxu0
      %859 = vmatprep.mubr.bf16.mxu0 %v453
      %860 = vmatmul.mubr.bf16.gmra.mrb[0].mxu0 %v452
      %v861 = vpop.f32.mrb[0].mxu0
      %v862 = vadd.f32 %v765, %v861
      %v863 = vpop.f32.mrb[0].mxu0
      %v864 = vpop.f32.mrb[0].mxu0
      %v865 = vadd.f32 %v768, %v864
      %v866 = vpop.f32.mrb[0].mxu0
      %867 = vmatprep.mubr.bf16.mxu0 %v457
      %868 = vmatmul.mubr.bf16.gmra.mrb[0].mxu0 %v456
      %v869 = vpop.f32.mrb[0].mxu0
      %v870 = vadd.f32 %v773, %v869
      %v871 = vpop.f32.mrb[0].mxu0
      %v872 = vpop.f32.mrb[0].mxu0
      %v873 = vadd.f32 %v776, %v872
      %v874 = vpop.f32.mrb[0].mxu0
      %875 = vdwg.mxu0
      %v876 = vld [vmem:[%s218] sm:$0xff]
      %v877 = vld [vmem:[%s218 + $0x8] sm:$0xff]
      %v878 = vld [vmem:[%s218 + $0x10] sm:$0xff]
      %v879 = vld [vmem:[%s218 + $0x18] sm:$0xff]
      %v880 = vld [vmem:[%s218 + $0x20] sm:$0xff]
      %v881 = vld [vmem:[%s218 + $0x28] sm:$0xff]
      %v882 = vld [vmem:[%s218 + $0x30] sm:$0xff]
      %v883 = vld [vmem:[%s218 + $0x38] sm:$0xff]
      %v884 = vld [vmem:[%s218 + $0x40] sm:$0xff]
      %v885 = vld [vmem:[%s218 + $0x48] sm:$0xff]
      %v886 = vld [vmem:[%s218 + $0x50] sm:$0xff]
      %v887 = vld [vmem:[%s218 + $0x58] sm:$0xff]
      %v888 = vld [vmem:[%s218 + $0x60] sm:$0xff]
      %v889 = vld [vmem:[%s218 + $0x68] sm:$0xff]
      %v890 = vld [vmem:[%s218 + $0x70] sm:$0xff]
      %v891 = vld [vmem:[%s218 + $0x78] sm:$0xff]
      %v892 = vadd.f32 %v814, %v876
      %v893 = vadd.f32 %v817, %v877
      %v894 = vadd.f32 %v822, %v878
      %v895 = vadd.f32 %v825, %v879
      %v896 = vadd.f32 %v830, %v880
      %v897 = vadd.f32 %v833, %v881
      %v898 = vadd.f32 %v838, %v882
      %v899 = vadd.f32 %v841, %v883
      %v900 = vadd.f32 %v846, %v884
      %v901 = vadd.f32 %v849, %v885
      %v902 = vadd.f32 %v854, %v886
      %v903 = vadd.f32 %v857, %v887
      %v904 = vadd.f32 %v862, %v888
      %v905 = vadd.f32 %v865, %v889
      %v906 = vadd.f32 %v870, %v890
      %v907 = vadd.f32 %v873, %v891
      %v908 = vmax.f32 %v892, 0.0
      %v909 = vmax.f32 %v893, 0.0
      %v910 = vmax.f32 %v894, 0.0
      %v911 = vmax.f32 %v895, 0.0
      %v912 = vmax.f32 %v896, 0.0
      %v913 = vmax.f32 %v897, 0.0
      %v914 = vmax.f32 %v898, 0.0
      %v915 = vmax.f32 %v899, 0.0
      %v916 = vmax.f32 %v900, 0.0
      %v917 = vmax.f32 %v901, 0.0
      %v918 = vmax.f32 %v902, 0.0
      %v919 = vmax.f32 %v903, 0.0
      %v920 = vmax.f32 %v904, 0.0
      %v921 = vmax.f32 %v905, 0.0
      %v922 = vmax.f32 %v906, 0.0
      %v923 = vmax.f32 %v907, 0.0
      %924 = vst [vmem:[%s224] sm:$0xff] %v908
      %925 = vst [vmem:[%s224 + $0x8] sm:$0xff] %v909
      %926 = vst [vmem:[%s224 + $0x10] sm:$0xff] %v910
      %927 = vst [vmem:[%s224 + $0x18] sm:$0xff] %v911
      %928 = vst [vmem:[%s224 + $0x20] sm:$0xff] %v912
      %929 = vst [vmem:[%s224 + $0x28] sm:$0xff] %v913
      %930 = vst [vmem:[%s224 + $0x30] sm:$0xff] %v914
      %931 = vst [vmem:[%s224 + $0x38] sm:$0xff] %v915
      %932 = vst [vmem:[%s224 + $0x40] sm:$0xff] %v916
      %933 = vst [vmem:[%s224 + $0x48] sm:$0xff] %v917
      %934 = vst [vmem:[%s224 + $0x50] sm:$0xff] %v918
      %935 = vst [vmem:[%s224 + $0x58] sm:$0xff] %v919
      %936 = vst [vmem:[%s224 + $0x60] sm:$0xff] %v920
      %937 = vst [vmem:[%s224 + $0x68] sm:$0xff] %v921
      %938 = vst [vmem:[%s224 + $0x70] sm:$0xff] %v922
      %939 = vst [vmem:[%s224 + $0x78] sm:$0xff] %v923
      %s940 = smul.u32 16, %s15
      %p941 = scmp.lt.s32.totalorder %s940, 63
      %s942 = scalar_select %p941, %s940, 63
      %s943 = smul.addr %s942, 8
      %s944 = scalar_lea.vmem %s4, %s943
      // Predicated region
      $region37: #{half_edge_resnet_forward.8} parent=35 // pred_check
        %p945 = pneg %p127
      $region38: #{half_edge_resnet_forward.8} parent=35 // pred_check_branch
        %947 = sbr.rel (%p945) target = $region40
      $region39: #{half_edge_resnet_forward.8} parent=35 // pred_region
        %s948 = smul.u32 16, %s15
      $region40: #{half_edge_resnet_forward.8} parent=35 // pred_fallthru
        _
    $region36: #{half_edge_resnet_forward.8} parent=5 // pred_fallthru
      _
    %p949 = scmp.le.s32.totalorder 2, %s10
    // Predicated region
    $region41: #{half_edge_resnet_forward.8} parent=5 // pred_check
      %p950 = pneg %p949
    $region42: #{half_edge_resnet_forward.8} parent=5 // pred_check_branch
      %952 = sbr.rel (%p950) target = $region44
    $region43: #{half_edge_resnet_forward.8} parent=5 // pred_region
      %s953 = ssub.s32 %s10, 2
      // Predicated region
      $region45: #{half_edge_resnet_forward.8} parent=43 // pred_check
        %p954 = pneg %p133
      $region46: #{half_edge_resnet_forward.8} parent=43 // pred_check_branch
        %956 = sbr.rel (%p954) target = $region48
      $region47: #{half_edge_resnet_forward.8} parent=43 // pred_region
        %s957 = smul.u32 16, %s16
        %p958 = scmp.lt.s32.totalorder %s957, 63
        %s959 = scalar_select %p958, %s957, 63
        %s960 = smul.addr %s959, 8
        %s961 = scalar_lea.vmem %s4, %s960
      $region48: #{half_edge_resnet_forward.8} parent=43 // pred_fallthru
        _
    $region44: #{half_edge_resnet_forward.8} parent=5 // pred_fallthru
      _
  $region6: #{half_edge_resnet_forward.8} parent=0 // loop_footer
    %s14 = sadd.s32 1, %s10
  $region7: #{half_edge_resnet_forward.8} parent=0 // loop_footer_branch
    %9 = sbr.rel target = $region3
  $region8: #{half_edge_resnet_forward.8} parent=0 // loop_exit
    _

// kernel: half_edge_resnet_forward.11
$region0: #{half_edge_resnet_forward.11}
  #allocation0 [shape = 'u32[]', space=smem, size = 0x4, offset = 0x4, fixed_abs, tag = 'smem constant byte address 0x4 - core index']
  #allocation1 [shape = 'u32[144,128]{1,0:T(1,128)}', space=vmem, size = 0x12000, scoped, tag = 'internal scratch']
  %s0 = inlined_call_operand.vmem [shape: f32[512,128], index: 0, kind: input, shape index: {}]
  %s1 = inlined_call_operand.vmem [shape: bf16[512,10], index: 1, kind: input, shape index: {}]
  %s2 = inlined_call_operand.vmem [shape: f32[1,10], index: 2, kind: input, shape index: {}]
  %s3 = inlined_call_operand.hbm [shape: f32[1,10], index: 3, kind: output, shape index: {}]
  %s4 = sld [smem:[#allocation0]]
  $region22: #{half_edge_resnet_forward.11} parent=0
    _
  %s6 = ssub.s32 1, %s4
  %s7 = scalar_select 0, %s6, %s4
  $region1: #{half_edge_resnet_forward.11} parent=0
    #allocation2 [shape = 'u8[512]{0}', space=vmem, size = 0x400, scoped, tag = 'output window, operand 0, single buffered']
    #allocation3 [shape = 's32[1]{0}', space=sflag, size = 0x4, scoped, tag = 'scoped memory for half_edge_resnet_forward.11']
    %8 = vsyncpa [#allocation3], 0
    // Predicated region
    $region2: #{half_edge_resnet_forward.11} parent=1 // pred_check
      _
    $region3: #{half_edge_resnet_forward.11} parent=1 // pred_check_branch
      %10 = sbr.rel (0) target = $region5
    $region4: #{half_edge_resnet_forward.11} parent=1 // pred_region
      _
    $region5: #{half_edge_resnet_forward.11} parent=1 // pred_fallthru
      _
    // Predicated region
    $region6: #{half_edge_resnet_forward.11} parent=1 // pred_check
      _
    $region7: #{half_edge_resnet_forward.11} parent=1 // pred_check_branch
      %12 = sbr.rel (0) target = $region9
    $region8: #{half_edge_resnet_forward.11} parent=1 // pred_region
      _
    $region9: #{half_edge_resnet_forward.11} parent=1 // pred_fallthru
      _
    // Predicated region
    $region10: #{half_edge_resnet_forward.11} parent=1 // pred_check
      _
    $region11: #{half_edge_resnet_forward.11} parent=1 // pred_check_branch
      %14 = sbr.rel (0) target = $region13
    $region12: #{half_edge_resnet_forward.11} parent=1 // pred_region
      _
    $region13: #{half_edge_resnet_forward.11} parent=1 // pred_fallthru
      _
    %v16 = vld [vmem:[%s2] sm:$0x1]
    %v17 = vld [vmem:[%s0] sm:$0xff]
    %v18 = vld [vmem:[%s0 + $0x8] sm:$0xff]
    %v19 = vld [vmem:[%s0 + $0x10] sm:$0xff]
    %v20 = vld [vmem:[%s0 + $0x18] sm:$0xff]
    %v21 = vld [vmem:[%s0 + $0x20] sm:$0xff]
    %v22 = vld [vmem:[%s0 + $0x28] sm:$0xff]
    %v23 = vld [vmem:[%s0 + $0x30] sm:$0xff]
    %v24 = vld [vmem:[%s0 + $0x38] sm:$0xff]
    %v25 = vld [vmem:[%s0 + $0x40] sm:$0xff]
    %v26 = vld [vmem:[%s0 + $0x48] sm:$0xff]
    %v27 = vld [vmem:[%s0 + $0x50] sm:$0xff]
    %v28 = vld [vmem:[%s0 + $0x58] sm:$0xff]
    %v29 = vld [vmem:[%s0 + $0x60] sm:$0xff]
    %v30 = vld [vmem:[%s0 + $0x68] sm:$0xff]
    %v31 = vld [vmem:[%s0 + $0x70] sm:$0xff]
    %v32 = vld [vmem:[%s0 + $0x78] sm:$0xff]
    %v33 = vadd.f32 %v17, %v18
    %v34 = vadd.f32 %v33, %v19
    %v35 = vadd.f32 %v34, %v20
    %v36 = vadd.f32 %v35, %v21
    %v37 = vadd.f32 %v36, %v22
    %v38 = vadd.f32 %v37, %v23
    %v39 = vadd.f32 %v38, %v24
    %v40 = vadd.f32 %v39, %v25
    %v41 = vadd.f32 %v40, %v26
    %v42 = vadd.f32 %v41, %v27
    %v43 = vadd.f32 %v42, %v28
    %v44 = vadd.f32 %v43, %v29
    %v45 = vadd.f32 %v44, %v30
    %v46 = vadd.f32 %v45, %v31
    %v47 = vadd.f32 %v46, %v32
    %v48 = vrot.slane %v47, 4
    %v49 = vadd.f32 %v47, %v48
    %v50 = vrot.slane %v49, 2
    %v51 = vadd.f32 %v49, %v50
    %v52 = vrot.slane %v51, 1
    %v53 = vadd.f32 %v51, %v52
    %v54 = vrcp.pop 128.0
    %v55 = vmul.f32 %v53, %v54
    %v56 = vpack.c.bf16 %v55, %v55
    %v57 = vld [vmem:[%s1] sm:$0xf]
    %v58 = vld [vmem:[%s1 + $0x4] sm:$0xf]
    %v59 = vld [vmem:[%s1 + $0x8] sm:$0xf]
    %v60 = vld [vmem:[%s1 + $0xc] sm:$0xf]
    %v61 = vld [vmem:[%s1 + $0x10] sm:$0xf]
    %v62 = vld [vmem:[%s1 + $0x14] sm:$0xf]
    %v63 = vld [vmem:[%s1 + $0x18] sm:$0xf]
    %v64 = vld [vmem:[%s1 + $0x1c] sm:$0xf]
    %v65 = vld [vmem:[%s1 + $0x20] sm:$0xf]
    %v66 = vld [vmem:[%s1 + $0x24] sm:$0xf]
    %v67 = vld [vmem:[%s1 + $0x28] sm:$0xf]
    %v68 = vld [vmem:[%s1 + $0x2c] sm:$0xf]
    %v69 = vld [vmem:[%s1 + $0x30] sm:$0xf]
    %v70 = vld [vmem:[%s1 + $0x34] sm:$0xf]
    %v71 = vld [vmem:[%s1 + $0x38] sm:$0xf]
    %v72 = vld [vmem:[%s1 + $0x3c] sm:$0xf]
    %v89 = vunpack.c.l.b16 %v57
    %v90 = vunpack.c.l.b16 %v58
    %v91 = vunpack.c.l.b16 %v59
    %v92 = vunpack.c.l.b16 %v60
    %v93 = vunpack.c.l.b16 %v61
    %v94 = vunpack.c.l.b16 %v62
    %v95 = vunpack.c.l.b16 %v63
    %v96 = vunpack.c.l.b16 %v64
    %v97 = vunpack.c.l.b16 %v65
    %v98 = vunpack.c.l.b16 %v66
    %v99 = vunpack.c.l.b16 %v67
    %v100 = vunpack.c.l.b16 %v68
    %v101 = vunpack.c.l.b16 %v69
    %v102 = vunpack.c.l.b16 %v70
    %v103 = vunpack.c.l.b16 %v71
    %v104 = vunpack.c.l.b16 %v72
    %v105 = vpack.c.b16 %v90, %v89
    %v106 = vpack.c.b16 %v92, %v91
    %v107 = vpack.c.b16 %v94, %v93
    %v108 = vpack.c.b16 %v96, %v95
    %v109 = vpack.c.b16 %v98, %v97
    %v110 = vpack.c.b16 %v100, %v99
    %v111 = vpack.c.b16 %v102, %v101
    %v112 = vpack.c.b16 %v104, %v103
    %121 = vmatprep.subr.bf16.mxu0 0
    %122 = vmatpush1.bf16.msra.mxu0 %v105
    %123 = vmatprep.subr.bf16.mxu0 0
    %124 = vmatpush1.bf16.msra.mxu0 %v106
    %125 = vmatprep.subr.bf16.mxu0 0
    %126 = vmatpush1.bf16.msra.mxu0 %v107
    %127 = vmatprep.subr.bf16.mxu0 0
    %128 = vmatpush1.bf16.msra.mxu0 %v108
    %129 = vmatprep.subr.bf16.mxu0 0
    %130 = vmatpush1.bf16.msra.mxu0 %v109
    %131 = vmatprep.subr.bf16.mxu0 0
    %132 = vmatpush1.bf16.msra.mxu0 %v110
    %133 = vmatprep.subr.bf16.mxu0 0
    %134 = vmatpush1.bf16.msra.mxu0 %v111
    %135 = vmatprep.subr.bf16.mxu0 0
    %136 = vmatpush1.bf16.msra.mxu0 %v112
    %137 = vmatprep.subr.bf16.mxu0 0
    %138 = vmatpush1.bf16.msra.mxu0 0
    %139 = vmatprep.subr.bf16.mxu0 0
    %140 = vmatpush1.bf16.msra.mxu0 0
    %141 = vmatprep.subr.bf16.mxu0 0
    %142 = vmatpush1.bf16.msra.mxu0 0
    %143 = vmatprep.subr.bf16.mxu0 0
    %144 = vmatpush1.bf16.msra.mxu0 0
    %145 = vmatprep.subr.bf16.mxu0 0
    %146 = vmatpush1.bf16.msra.mxu0 0
    %147 = vmatprep.subr.bf16.mxu0 0
    %148 = vmatpush1.bf16.msra.mxu0 0
    %149 = vmatprep.subr.bf16.mxu0 0
    %150 = vmatpush1.bf16.msra.mxu0 0
    %151 = vmatprep.subr.bf16.mxu0 0
    %152 = vmatpush1.bf16.msra.mxu0 0
    %153 = vmatprep.mubr.bf16.mxu0 0
    %154 = vmatmul.mubr.bf16.gmra.mrb[0].mxu0 %v56
    %v155 = vpop.f32.mrb[0].mxu0
    %v156 = vadd.f32 0.0, %v155
    %v157 = vpop.f32.mrb[0].mxu0
    %v158 = vpop.f32.mrb[0].mxu0
    %v159 = vpop.f32.mrb[0].mxu0
    %160 = vdwg.mxu0
    %v161 = vadd.f32 %v16, %v156
    %v162 = vld [vmem:[%s0 + $0x80] sm:$0xff]
    %v163 = vld [vmem:[%s0 + $0x88] sm:$0xff]
    %v164 = vld [vmem:[%s0 + $0x90] sm:$0xff]
    %v165 = vld [vmem:[%s0 + $0x98] sm:$0xff]
    %v166 = vld [vmem:[%s0 + $0xa0] sm:$0xff]
    %v167 = vld [vmem:[%s0 + $0xa8] sm:$0xff]
    %v168 = vld [vmem:[%s0 + $0xb0] sm:$0xff]
    %v169 = vld [vmem:[%s0 + $0xb8] sm:$0xff]
    %v170 = vld [vmem:[%s0 + $0xc0] sm:$0xff]
    %v171 = vld [vmem:[%s0 + $0xc8] sm:$0xff]
    %v172 = vld [vmem:[%s0 + $0xd0] sm:$0xff]
    %v173 = vld [vmem:[%s0 + $0xd8] sm:$0xff]
    %v174 = vld [vmem:[%s0 + $0xe0] sm:$0xff]
    %v175 = vld [vmem:[%s0 + $0xe8] sm:$0xff]
    %v176 = vld [vmem:[%s0 + $0xf0] sm:$0xff]
    %v177 = vld [vmem:[%s0 + $0xf8] sm:$0xff]
    %v178 = vadd.f32 %v162, %v163
    %v179 = vadd.f32 %v178, %v164
    %v180 = vadd.f32 %v179, %v165
    %v181 = vadd.f32 %v180, %v166
    %v182 = vadd.f32 %v181, %v167
    %v183 = vadd.f32 %v182, %v168
    %v184 = vadd.f32 %v183, %v169
    %v185 = vadd.f32 %v184, %v170
    %v186 = vadd.f32 %v185, %v171
    %v187 = vadd.f32 %v186, %v172
    %v188 = vadd.f32 %v187, %v173
    %v189 = vadd.f32 %v188, %v174
    %v190 = vadd.f32 %v189, %v175
    %v191 = vadd.f32 %v190, %v176
    %v192 = vadd.f32 %v191, %v177
    %v193 = vrot.slane %v192, 4
    %v194 = vadd.f32 %v192, %v193
    %v195 = vrot.slane %v194, 2
    %v196 = vadd.f32 %v194, %v195
    %v197 = vrot.slane %v196, 1
    %v198 = vadd.f32 %v196, %v197
    %v199 = vmul.f32 %v198, %v54
    %v200 = vpack.c.bf16 %v199, %v199
    %v201 = vld [vmem:[%s1 + $0x40] sm:$0xf]
    %v202 = vld [vmem:[%s1 + $0x44] sm:$0xf]
    %v203 = vld [vmem:[%s1 + $0x48] sm:$0xf]
    %v204 = vld [vmem:[%s1 + $0x4c] sm:$0xf]
    %v205 = vld [vmem:[%s1 + $0x50] sm:$0xf]
    %v206 = vld [vmem:[%s1 + $0x54] sm:$0xf]
    %v207 = vld [vmem:[%s1 + $0x58] sm:$0xf]
    %v208 = vld [vmem:[%s1 + $0x5c] sm:$0xf]
    %v209 = vld [vmem:[%s1 + $0x60] sm:$0xf]
    %v210 = vld [vmem:[%s1 + $0x64] sm:$0xf]
    %v211 = vld [vmem:[%s1 + $0x68] sm:$0xf]
    %v212 = vld [vmem:[%s1 + $0x6c] sm:$0xf]
    %v213 = vld [vmem:[%s1 + $0x70] sm:$0xf]
    %v214 = vld [vmem:[%s1 + $0x74] sm:$0xf]
    %v215 = vld [vmem:[%s1 + $0x78] sm:$0xf]
    %v216 = vld [vmem:[%s1 + $0x7c] sm:$0xf]
    %v233 = vunpack.c.l.b16 %v201
    %v234 = vunpack.c.l.b16 %v202
    %v235 = vunpack.c.l.b16 %v203
    %v236 = vunpack.c.l.b16 %v204
    %v237 = vunpack.c.l.b16 %v205
    %v238 = vunpack.c.l.b16 %v206
    %v239 = vunpack.c.l.b16 %v207
    %v240 = vunpack.c.l.b16 %v208
    %v241 = vunpack.c.l.b16 %v209
    %v242 = vunpack.c.l.b16 %v210
    %v243 = vunpack.c.l.b16 %v211
    %v244 = vunpack.c.l.b16 %v212
    %v245 = vunpack.c.l.b16 %v213
    %v246 = vunpack.c.l.b16 %v214
    %v247 = vunpack.c.l.b16 %v215
    %v248 = vunpack.c.l.b16 %v216
    %v249 = vpack.c.b16 %v234, %v233
    %v250 = vpack.c.b16 %v236, %v235
    %v251 = vpack.c.b16 %v238, %v237
    %v252 = vpack.c.b16 %v240, %v239
    %v253 = vpack.c.b16 %v242, %v241
    %v254 = vpack.c.b16 %v244, %v243
    %v255 = vpack.c.b16 %v246, %v245
    %v256 = vpack.c.b16 %v248, %v247
    %265 = vmatprep.subr.bf16.mxu0 0
    %266 = vmatpush1.bf16.msra.mxu0 %v249
    %267 = vmatprep.subr.bf16.mxu0 0
    %268 = vmatpush1.bf16.msra.mxu0 %v250
    %269 = vmatprep.subr.bf16.mxu0 0
    %270 = vmatpush1.bf16.msra.mxu0 %v251
    %271 = vmatprep.subr.bf16.mxu0 0
    %272 = vmatpush1.bf16.msra.mxu0 %v252
    %273 = vmatprep.subr.bf16.mxu0 0
    %274 = vmatpush1.bf16.msra.mxu0 %v253
    %275 = vmatprep.subr.bf16.mxu0 0
    %276 = vmatpush1.bf16.msra.mxu0 %v254
    %277 = vmatprep.subr.bf16.mxu0 0
    %278 = vmatpush1.bf16.msra.mxu0 %v255
    %279 = vmatprep.subr.bf16.mxu0 0
    %280 = vmatpush1.bf16.msra.mxu0 %v256
    %281 = vmatprep.subr.bf16.mxu0 0
    %282 = vmatpush1.bf16.msra.mxu0 0
    %283 = vmatprep.subr.bf16.mxu0 0
    %284 = vmatpush1.bf16.msra.mxu0 0
    %285 = vmatprep.subr.bf16.mxu0 0
    %286 = vmatpush1.bf16.msra.mxu0 0
    %287 = vmatprep.subr.bf16.mxu0 0
    %288 = vmatpush1.bf16.msra.mxu0 0
    %289 = vmatprep.subr.bf16.mxu0 0
    %290 = vmatpush1.bf16.msra.mxu0 0
    %291 = vmatprep.subr.bf16.mxu0 0
    %292 = vmatpush1.bf16.msra.mxu0 0
    %293 = vmatprep.subr.bf16.mxu0 0
    %294 = vmatpush1.bf16.msra.mxu0 0
    %295 = vmatprep.subr.bf16.mxu0 0
    %296 = vmatpush1.bf16.msra.mxu0 0
    %297 = vmatprep.mubr.bf16.mxu0 0
    %298 = vmatmul.mubr.bf16.gmra.mrb[0].mxu0 %v200
    %v299 = vpop.f32.mrb[0].mxu0
    %v300 = vadd.f32 0.0, %v299
    %v301 = vpop.f32.mrb[0].mxu0
    %v302 = vpop.f32.mrb[0].mxu0
    %v303 = vpop.f32.mrb[0].mxu0
    %304 = vdwg.mxu0
    %v305 = vadd.f32 %v161, %v300
    %v306 = vld [vmem:[%s0 + $0x100] sm:$0xff]
    %v307 = vld [vmem:[%s0 + $0x108] sm:$0xff]
    %v308 = vld [vmem:[%s0 + $0x110] sm:$0xff]
    %v309 = vld [vmem:[%s0 + $0x118] sm:$0xff]
    %v310 = vld [vmem:[%s0 + $0x120] sm:$0xff]
    %v311 = vld [vmem:[%s0 + $0x128] sm:$0xff]
    %v312 = vld [vmem:[%s0 + $0x130] sm:$0xff]
    %v313 = vld [vmem:[%s0 + $0x138] sm:$0xff]
    %v314 = vld [vmem:[%s0 + $0x140] sm:$0xff]
    %v315 = vld [vmem:[%s0 + $0x148] sm:$0xff]
    %v316 = vld [vmem:[%s0 + $0x150] sm:$0xff]
    %v317 = vld [vmem:[%s0 + $0x158] sm:$0xff]
    %v318 = vld [vmem:[%s0 + $0x160] sm:$0xff]
    %v319 = vld [vmem:[%s0 + $0x168] sm:$0xff]
    %v320 = vld [vmem:[%s0 + $0x170] sm:$0xff]
    %v321 = vld [vmem:[%s0 + $0x178] sm:$0xff]
    %v322 = vadd.f32 %v306, %v307
    %v323 = vadd.f32 %v322, %v308
    %v324 = vadd.f32 %v323, %v309
    %v325 = vadd.f32 %v324, %v310
    %v326 = vadd.f32 %v325, %v311
    %v327 = vadd.f32 %v326, %v312
    %v328 = vadd.f32 %v327, %v313
    %v329 = vadd.f32 %v328, %v314
    %v330 = vadd.f32 %v329, %v315
    %v331 = vadd.f32 %v330, %v316
    %v332 = vadd.f32 %v331, %v317
    %v333 = vadd.f32 %v332, %v318
    %v334 = vadd.f32 %v333, %v319
    %v335 = vadd.f32 %v334, %v320
    %v336 = vadd.f32 %v335, %v321
    %v337 = vrot.slane %v336, 4
    %v338 = vadd.f32 %v336, %v337
    %v339 = vrot.slane %v338, 2
    %v340 = vadd.f32 %v338, %v339
    %v341 = vrot.slane %v340, 1
    %v342 = vadd.f32 %v340, %v341
    %v343 = vmul.f32 %v342, %v54
    %v344 = vpack.c.bf16 %v343, %v343
    %v345 = vld [vmem:[%s1 + $0x80] sm:$0xf]
    %v346 = vld [vmem:[%s1 + $0x84] sm:$0xf]
    %v347 = vld [vmem:[%s1 + $0x88] sm:$0xf]
    %v348 = vld [vmem:[%s1 + $0x8c] sm:$0xf]
    %v349 = vld [vmem:[%s1 + $0x90] sm:$0xf]
    %v350 = vld [vmem:[%s1 + $0x94] sm:$0xf]
    %v351 = vld [vmem:[%s1 + $0x98] sm:$0xf]
    %v352 = vld [vmem:[%s1 + $0x9c] sm:$0xf]
    %v353 = vld [vmem:[%s1 + $0xa0] sm:$0xf]
    %v354 = vld [vmem:[%s1 + $0xa4] sm:$0xf]
    %v355 = vld [vmem:[%s1 + $0xa8] sm:$0xf]
    %v356 = vld [vmem:[%s1 + $0xac] sm:$0xf]
    %v357 = vld [vmem:[%s1 + $0xb0] sm:$0xf]
    %v358 = vld [vmem:[%s1 + $0xb4] sm:$0xf]
    %v359 = vld [vmem:[%s1 + $0xb8] sm:$0xf]
    %v360 = vld [vmem:[%s1 + $0xbc] sm:$0xf]
    %v377 = vunpack.c.l.b16 %v345
    %v378 = vunpack.c.l.b16 %v346
    %v379 = vunpack.c.l.b16 %v347
    %v380 = vunpack.c.l.b16 %v348
    %v381 = vunpack.c.l.b16 %v349
    %v382 = vunpack.c.l.b16 %v350
    %v383 = vunpack.c.l.b16 %v351
    %v384 = vunpack.c.l.b16 %v352
    %v385 = vunpack.c.l.b16 %v353
    %v386 = vunpack.c.l.b16 %v354
    %v387 = vunpack.c.l.b16 %v355
    %v388 = vunpack.c.l.b16 %v356
    %v389 = vunpack.c.l.b16 %v357
    %v390 = vunpack.c.l.b16 %v358
    %v391 = vunpack.c.l.b16 %v359
    %v392 = vunpack.c.l.b16 %v360
    %v393 = vpack.c.b16 %v378, %v377
    %v394 = vpack.c.b16 %v380, %v379
    %v395 = vpack.c.b16 %v382, %v381
    %v396 = vpack.c.b16 %v384, %v383
    %v397 = vpack.c.b16 %v386, %v385
    %v398 = vpack.c.b16 %v388, %v387
    %v399 = vpack.c.b16 %v390, %v389
    %v400 = vpack.c.b16 %v392, %v391
    %409 = vmatprep.subr.bf16.mxu0 0
    %410 = vmatpush1.bf16.msra.mxu0 %v393
    %411 = vmatprep.subr.bf16.mxu0 0
    %412 = vmatpush1.bf16.msra.mxu0 %v394
    %413 = vmatprep.subr.bf16.mxu0 0
    %414 = vmatpush1.bf16.msra.mxu0 %v395
    %415 = vmatprep.subr.bf16.mxu0 0
    %416 = vmatpush1.bf16.msra.mxu0 %v396
    %417 = vmatprep.subr.bf16.mxu0 0
    %418 = vmatpush1.bf16.msra.mxu0 %v397
    %419 = vmatprep.subr.bf16.mxu0 0
    %420 = vmatpush1.bf16.msra.mxu0 %v398
    %421 = vmatprep.subr.bf16.mxu0 0
    %422 = vmatpush1.bf16.msra.mxu0 %v399
    %423 = vmatprep.subr.bf16.mxu0 0
    %424 = vmatpush1.bf16.msra.mxu0 %v400
    %425 = vmatprep.subr.bf16.mxu0 0
    %426 = vmatpush1.bf16.msra.mxu0 0
    %427 = vmatprep.subr.bf16.mxu0 0
    %428 = vmatpush1.bf16.msra.mxu0 0
    %429 = vmatprep.subr.bf16.mxu0 0
    %430 = vmatpush1.bf16.msra.mxu0 0
    %431 = vmatprep.subr.bf16.mxu0 0
    %432 = vmatpush1.bf16.msra.mxu0 0
    %433 = vmatprep.subr.bf16.mxu0 0
    %434 = vmatpush1.bf16.msra.mxu0 0
    %435 = vmatprep.subr.bf16.mxu0 0
    %436 = vmatpush1.bf16.msra.mxu0 0
    %437 = vmatprep.subr.bf16.mxu0 0
    %438 = vmatpush1.bf16.msra.mxu0 0
    %439 = vmatprep.subr.bf16.mxu0 0
    %440 = vmatpush1.bf16.msra.mxu0 0
    %441 = vmatprep.mubr.bf16.mxu0 0
    %442 = vmatmul.mubr.bf16.gmra.mrb[0].mxu0 %v344
    %v443 = vpop.f32.mrb[0].mxu0
    %v444 = vadd.f32 0.0, %v443
    %v445 = vpop.f32.mrb[0].mxu0
    %v446 = vpop.f32.mrb[0].mxu0
    %v447 = vpop.f32.mrb[0].mxu0
    %448 = vdwg.mxu0
    %v449 = vadd.f32 %v305, %v444
    %v450 = vld [vmem:[%s0 + $0x180] sm:$0xff]
    %v451 = vld [vmem:[%s0 + $0x188] sm:$0xff]
    %v452 = vld [vmem:[%s0 + $0x190] sm:$0xff]
    %v453 = vld [vmem:[%s0 + $0x198] sm:$0xff]
    %v454 = vld [vmem:[%s0 + $0x1a0] sm:$0xff]
    %v455 = vld [vmem:[%s0 + $0x1a8] sm:$0xff]
    %v456 = vld [vmem:[%s0 + $0x1b0] sm:$0xff]
    %v457 = vld [vmem:[%s0 + $0x1b8] sm:$0xff]
    %v458 = vld [vmem:[%s0 + $0x1c0] sm:$0xff]
    %v459 = vld [vmem:[%s0 + $0x1c8] sm:$0xff]
    %v460 = vld [vmem:[%s0 + $0x1d0] sm:$0xff]
    %v461 = vld [vmem:[%s0 + $0x1d8] sm:$0xff]
    %v462 = vld [vmem:[%s0 + $0x1e0] sm:$0xff]
    %v463 = vld [vmem:[%s0 + $0x1e8] sm:$0xff]
    %v464 = vld [vmem:[%s0 + $0x1f0] sm:$0xff]
    %v465 = vld [vmem:[%s0 + $0x1f8] sm:$0xff]
    %v466 = vadd.f32 %v450, %v451
    %v467 = vadd.f32 %v466, %v452
    %v468 = vadd.f32 %v467, %v453
    %v469 = vadd.f32 %v468, %v454
    %v470 = vadd.f32 %v469, %v455
    %v471 = vadd.f32 %v470, %v456
    %v472 = vadd.f32 %v471, %v457
    %v473 = vadd.f32 %v472, %v458
    %v474 = vadd.f32 %v473, %v459
    %v475 = vadd.f32 %v474, %v460
    %v476 = vadd.f32 %v475, %v461
    %v477 = vadd.f32 %v476, %v462
    %v478 = vadd.f32 %v477, %v463
    %v479 = vadd.f32 %v478, %v464
    %v480 = vadd.f32 %v479, %v465
    %v481 = vrot.slane %v480, 4
    %v482 = vadd.f32 %v480, %v481
    %v483 = vrot.slane %v482, 2
    %v484 = vadd.f32 %v482, %v483
    %v485 = vrot.slane %v484, 1
    %v486 = vadd.f32 %v484, %v485
    %v487 = vmul.f32 %v486, %v54
    %v488 = vpack.c.bf16 %v487, %v487
    %v489 = vld [vmem:[%s1 + $0xc0] sm:$0xf]
    %v490 = vld [vmem:[%s1 + $0xc4] sm:$0xf]
    %v491 = vld [vmem:[%s1 + $0xc8] sm:$0xf]
    %v492 = vld [vmem:[%s1 + $0xcc] sm:$0xf]
    %v493 = vld [vmem:[%s1 + $0xd0] sm:$0xf]
    %v494 = vld [vmem:[%s1 + $0xd4] sm:$0xf]
    %v495 = vld [vmem:[%s1 + $0xd8] sm:$0xf]
    %v496 = vld [vmem:[%s1 + $0xdc] sm:$0xf]
    %v497 = vld [vmem:[%s1 + $0xe0] sm:$0xf]
    %v498 = vld [vmem:[%s1 + $0xe4] sm:$0xf]
    %v499 = vld [vmem:[%s1 + $0xe8] sm:$0xf]
    %v500 = vld [vmem:[%s1 + $0xec] sm:$0xf]
    %v501 = vld [vmem:[%s1 + $0xf0] sm:$0xf]
    %v502 = vld [vmem:[%s1 + $0xf4] sm:$0xf]
    %v503 = vld [vmem:[%s1 + $0xf8] sm:$0xf]
    %v504 = vld [vmem:[%s1 + $0xfc] sm:$0xf]
    %v521 = vunpack.c.l.b16 %v489
    %v522 = vunpack.c.l.b16 %v490
    %v523 = vunpack.c.l.b16 %v491
    %v524 = vunpack.c.l.b16 %v492
    %v525 = vunpack.c.l.b16 %v493
    %v526 = vunpack.c.l.b16 %v494
    %v527 = vunpack.c.l.b16 %v495
    %v528 = vunpack.c.l.b16 %v496
    %v529 = vunpack.c.l.b16 %v497
    %v530 = vunpack.c.l.b16 %v498
    %v531 = vunpack.c.l.b16 %v499
    %v532 = vunpack.c.l.b16 %v500
    %v533 = vunpack.c.l.b16 %v501
    %v534 = vunpack.c.l.b16 %v502
    %v535 = vunpack.c.l.b16 %v503
    %v536 = vunpack.c.l.b16 %v504
    %v537 = vpack.c.b16 %v522, %v521
    %v538 = vpack.c.b16 %v524, %v523
    %v539 = vpack.c.b16 %v526, %v525
    %v540 = vpack.c.b16 %v528, %v527
    %v541 = vpack.c.b16 %v530, %v529
    %v542 = vpack.c.b16 %v532, %v531
    %v543 = vpack.c.b16 %v534, %v533
    %v544 = vpack.c.b16 %v536, %v535
    %553 = vmatprep.subr.bf16.mxu0 0
    %554 = vmatpush1.bf16.msra.mxu0 %v537
    %555 = vmatprep.subr.bf16.mxu0 0
    %556 = vmatpush1.bf16.msra.mxu0 %v538
    %557 = vmatprep.subr.bf16.mxu0 0
    %558 = vmatpush1.bf16.msra.mxu0 %v539
    %559 = vmatprep.subr.bf16.mxu0 0
    %560 = vmatpush1.bf16.msra.mxu0 %v540
    %561 = vmatprep.subr.bf16.mxu0 0
    %562 = vmatpush1.bf16.msra.mxu0 %v541
    %563 = vmatprep.subr.bf16.mxu0 0
    %564 = vmatpush1.bf16.msra.mxu0 %v542
    %565 = vmatprep.subr.bf16.mxu0 0
    %566 = vmatpush1.bf16.msra.mxu0 %v543
    %567 = vmatprep.subr.bf16.mxu0 0
    %568 = vmatpush1.bf16.msra.mxu0 %v544
    %569 = vmatprep.subr.bf16.mxu0 0
    %570 = vmatpush1.bf16.msra.mxu0 0
    %571 = vmatprep.subr.bf16.mxu0 0
    %572 = vmatpush1.bf16.msra.mxu0 0
    %573 = vmatprep.subr.bf16.mxu0 0
    %574 = vmatpush1.bf16.msra.mxu0 0
    %575 = vmatprep.subr.bf16.mxu0 0
    %576 = vmatpush1.bf16.msra.mxu0 0
    %577 = vmatprep.subr.bf16.mxu0 0
    %578 = vmatpush1.bf16.msra.mxu0 0
    %579 = vmatprep.subr.bf16.mxu0 0
    %580 = vmatpush1.bf16.msra.mxu0 0
    %581 = vmatprep.subr.bf16.mxu0 0
    %582 = vmatpush1.bf16.msra.mxu0 0
    %583 = vmatprep.subr.bf16.mxu0 0
    %584 = vmatpush1.bf16.msra.mxu0 0
    %585 = vmatprep.mubr.bf16.mxu0 0
    %586 = vmatmul.mubr.bf16.gmra.mrb[0].mxu0 %v488
    %v587 = vpop.f32.mrb[0].mxu0
    %v588 = vadd.f32 0.0, %v587
    %v589 = vpop.f32.mrb[0].mxu0
    %v590 = vpop.f32.mrb[0].mxu0
    %v591 = vpop.f32.mrb[0].mxu0
    %592 = vdwg.mxu0
    %v593 = vadd.f32 %v449, %v588
    %vm594 = vcmask 73728
    %595 = vst.msk [vmem:[#allocation2] sm:$0x1] %vm594, %v593
    // Predicated region
    $region14: #{half_edge_resnet_forward.11} parent=1 // pred_check
      _
    $region15: #{half_edge_resnet_forward.11} parent=1 // pred_check_branch
      %597 = sbr.rel (0) target = $region17
    $region16: #{half_edge_resnet_forward.11} parent=1 // pred_region
      %s599 = ssub.s32 16, 16
      %600 = vsyncadd [#allocation3], %s599
      %s602 = sshll.u32 [#allocation2], 4
      %s603 = int_to_ptr.vmem [resolvable:$true] %s602
      %605 = dma.vmem_to_hbm [thread:$0]  %s603, 16, %s3, [#allocation3]
    $region17: #{half_edge_resnet_forward.11} parent=1 // pred_fallthru
      _
    // Predicated region
    $region18: #{half_edge_resnet_forward.11} parent=1 // pred_check
      _
    $region19: #{half_edge_resnet_forward.11} parent=1 // pred_check_branch
      %607 = sbr.rel (0) target = $region21
    $region20: #{half_edge_resnet_forward.11} parent=1 // pred_region
      %608 = dma.done [#allocation3], 16
    $region21: #{half_edge_resnet_forward.11} parent=1 // pred_fallthru
      _
    %609 = vsyncpa [#allocation3], 1

</llo_original>
